<compile_context>
chip_gen: v7x
topology: tpu7x:2x2x1
jax: 0.10.0
libtpu: 0.0.40
codegen_flags: <defaults>
</compile_context>

<pallas_src>
import functools

import jax
import jax.numpy as jnp
from jax.experimental import pallas as pl
from jax.experimental.pallas import tpu as pltpu


def _round_up(n, m):
    return ((n + m - 1) // m) * m


def _pick_vmem_limit():
    """Per-generation scoped-VMEM limit: ~75% of physical, clamped to [32,100] MiB."""
    default = 32 * 1024 * 1024
    try:
        cap = getattr(pltpu.get_tpu_info(), "vmem_capacity_bytes", None)
        if cap:
            return int(max(default, min(cap * 3 // 4, 100 * 1024 * 1024)))
    except Exception:
        pass
    return default


def _pick_tile_rows(S, c_pad, hidden, vmem_limit):
    """Largest spatial tile whose pipeline footprint fits the VMEM budget."""
    # resident: weights (<=2 buffers) + bias + [8,hidden] accumulator + out block
    fixed = 2 * c_pad * hidden * 2 + 2 * hidden * 4 + 8 * hidden * 4 + hidden * 4
    budget = int(vmem_limit * 0.7) - fixed        # headroom for spill scratch
    for t in (4096, 2048, 1024, 512, 256, 128, 64, 32, 16, 8):
        if S % t:
            continue
        x_bytes = 2 * t * c_pad * 4               # double-buffered f32 input tile
        xb_bytes = t * c_pad * 2                  # in-kernel bf16 copy of the tile
        h_bytes = 2 * t * hidden * 4              # f32 conv/ReLU intermediate (+slack)
        if x_bytes + xb_bytes + h_bytes <= budget:
            return t
    return S  # full-extent block is always a legal BlockSpec


# --------------------------------------------------------------------------
# Kernel 1: 1x1 conv + ReLU + global average pool (per-image accumulator)
# --------------------------------------------------------------------------
def backbone_pool_kernel(x_ref, w1_ref, b1_ref, pooled_ref, acc_ref, *, inv_s):
    # x_ref:      [1, tile_rows, C_pad] f32   pixels of image b, channels last
    # w1_ref:     [C_pad, HIDDEN] bf16        1x1-conv weight
    # b1_ref:     [1, HIDDEN] f32
    # pooled_ref: [1, 1, HIDDEN] f32          pooled features for image b
    # acc_ref:    [8, HIDDEN] f32 scratch     running per-sublane partial sums
    s = pl.program_id(1)

    @pl.when(s == 0)
    def _init():
        acc_ref[...] = jnp.zeros_like(acc_ref)

    # bf16 cast on the VPU (avoids a wrapper-side HBM pass over x); MXU matmul
    # with f32 accumulation; bias + ReLU in f32 (v5e has no bf16 VPU).
    xb = x_ref[0].astype(jnp.bfloat16)
    h = jnp.dot(xb, w1_ref[...], preferred_element_type=jnp.float32)
    h = jnp.maximum(h + b1_ref[...], 0.0)               # [tile_rows, HIDDEN]

    rows, hidden = h.shape
    if rows % 8 == 0:
        # VPU-only partial sums into an [8, HIDDEN] accumulator; the
        # cross-sublane 8->1 reduce is deferred to the finalize step.
        acc_ref[...] += jnp.sum(h.reshape(rows // 8, 8, hidden), axis=0)
    else:
        acc_ref[0:1, :] += jnp.sum(h, axis=0, keepdims=True)

    @pl.when(s == pl.num_programs(1) - 1)
    def _finalize():
        pooled = jnp.sum(acc_ref[...], axis=0, keepdims=True) * inv_s
        pooled_ref[0] = pooled.astype(pooled_ref.dtype)


def _backbone_call(B, S, C_pad, hidden, tile_rows, vmem_limit, inv_s,
                   single_buffer_weights):
    num_s = S // tile_rows
    wkw = {"pipeline_mode": pl.Buffered(1)} if single_buffer_weights else {}
    kernel = functools.partial(backbone_pool_kernel, inv_s=inv_s)
    flops = 2 * B * S * C_pad * hidden
    bytes_accessed = (B * S * C_pad * 4 + C_pad * hidden * 2 + hidden * 4
                      + B * hidden * 4)
    return pl.pallas_call(
        kernel,
        out_shape=jax.ShapeDtypeStruct((B, 1, hidden), jnp.float32),
        grid_spec=pltpu.PrefetchScalarGridSpec(
            num_scalar_prefetch=0,
            grid=(B, num_s),
            in_specs=[
                pl.BlockSpec((1, tile_rows, C_pad), lambda b, s: (b, s, 0)),
                pl.BlockSpec((C_pad, hidden), lambda b, s: (0, 0), **wkw),
                pl.BlockSpec((1, hidden), lambda b, s: (0, 0), **wkw),
            ],
            out_specs=pl.BlockSpec((1, 1, hidden), lambda b, s: (b, 0, 0)),
            scratch_shapes=[pltpu.VMEM((8, hidden), jnp.float32)],
        ),
        compiler_params=pltpu.CompilerParams(
            dimension_semantics=("parallel", "arbitrary"),
            vmem_limit_bytes=vmem_limit,
        ),
        cost_estimate=pl.CostEstimate(
            flops=flops, transcendentals=0, bytes_accessed=bytes_accessed),
    )


# --------------------------------------------------------------------------
# Kernel 2: batched FC + exact softmax epilogue (tiny, one grid step)
# --------------------------------------------------------------------------
def fc_softmax_kernel(pooled_ref, w2_ref, b2_ref, out_ref):
    # pooled_ref: [B, HIDDEN] f32, w2_ref: [HIDDEN, K_pad] f32,
    # b2_ref: [1, K_pad] f32 (padded classes hold -1e30), out_ref: [B, K_pad]
    logits = jnp.dot(pooled_ref[...], w2_ref[...],
                     preferred_element_type=jnp.float32) + b2_ref[...]
    m = jnp.max(logits, axis=1, keepdims=True)
    e = jnp.exp(logits - m)
    out_ref[...] = (e / jnp.sum(e, axis=1, keepdims=True)).astype(out_ref.dtype)


def _fc_softmax_call(B, hidden, K_pad):
    return pl.pallas_call(
        fc_softmax_kernel,
        out_shape=jax.ShapeDtypeStruct((B, K_pad), jnp.float32),
        grid_spec=pltpu.PrefetchScalarGridSpec(
            num_scalar_prefetch=0,
            grid=(1,),
            in_specs=[
                pl.BlockSpec((B, hidden), lambda i: (0, 0)),
                pl.BlockSpec((hidden, K_pad), lambda i: (0, 0)),
                pl.BlockSpec((1, K_pad), lambda i: (0, 0)),
            ],
            out_specs=pl.BlockSpec((B, K_pad), lambda i: (0, 0)),
        ),
        compiler_params=pltpu.CompilerParams(
            dimension_semantics=("arbitrary",)),
        cost_estimate=pl.CostEstimate(
            flops=2 * B * hidden * K_pad,
            transcendentals=B * K_pad,
            bytes_accessed=(B * hidden + hidden * K_pad + K_pad + B * K_pad) * 4),
    )


# --------------------------------------------------------------------------
# Wrappers
# --------------------------------------------------------------------------
def classifier_forward_nhwc(x_nhwc, w1, b1, w2, b2, *, tile_rows=None):
    """x_nhwc: [B, H, W, C] float32 (channels-last) -- preferred entry point."""
    B, H, W, C = x_nhwc.shape
    S = H * W
    hidden = w1.shape[1]
    K = w2.shape[1]

    # Lane-dense contraction dim. Only pads when C % 128 != 0 (toy channel
    # counts); real backbone heads (1280/2048/...) skip this extra pass.
    C_pad = _round_up(C, 128)
    x3 = x_nhwc.reshape(B, S, C)                     # free: no data movement
    if C_pad != C:
        x3 = jnp.pad(x3, ((0, 0), (0, 0), (0, C_pad - C)))
        w1 = jnp.pad(w1, ((0, C_pad - C), (0, 0)))

    # Weights are tiny: one-time casts/pads, kept resident in VMEM.
    w1_bf = w1.astype(jnp.bfloat16)
    b1_2d = b1.reshape(1, hidden).astype(jnp.float32)

    vmem_limit = _pick_vmem_limit()
    if tile_rows is None:
        tile_rows = _pick_tile_rows(S, C_pad, hidden, vmem_limit)
    assert S % tile_rows == 0, "tile_rows must divide H*W"
    inv_s = 1.0 / S

    try:
        pooled3 = _backbone_call(B, S, C_pad, hidden, tile_rows, vmem_limit,
                                 inv_s, single_buffer_weights=True)(
                                     x3, w1_bf, b1_2d)
    except Exception:
        # pl.Buffered(1) not supported on this jax/libtpu: default buffering.
        pooled3 = _backbone_call(B, S, C_pad, hidden, tile_rows, vmem_limit,
                                 inv_s, single_buffer_weights=False)(
                                     x3, w1_bf, b1_2d)
    pooled = pooled3.reshape(B, hidden)              # tiny

    # Batched FC + softmax; pad K to a lane-dense multiple of 128, padded
    # logits are driven to -inf-like so their softmax mass is exactly 0.
    K_pad = _round_up(K, 128)
    w2_f = w2.astype(jnp.float32)
    b2_2d = b2.reshape(1, K).astype(jnp.float32)
    if K_pad != K:
        w2_f = jnp.pad(w2_f, ((0, 0), (0, K_pad - K)))
        b2_2d = jnp.pad(b2_2d, ((0, 0), (0, K_pad - K)), constant_values=-1e30)

    probs_pad = _fc_softmax_call(B, hidden, K_pad)(pooled, w2_f, b2_2d)
    return probs_pad[:, :K]


def classifier_forward(x_nchw, w1, b1, w2, b2, *, tile_rows=None):
    """PyTorch-layout entry point (NCHW). The permute is one extra HBM pass
    over x; feed channels-last activations to classifier_forward_nhwc in
    production."""
    x_nhwc = jnp.transpose(x_nchw, (0, 2, 3, 1))
    return classifier_forward_nhwc(x_nhwc, w1, b1, w2, b2, tile_rows=tile_rows)


if __name__ == "__main__":
    # small shapes consistent with an image classifier head
    B, C, H, W = 2, 8, 16, 16
    HIDDEN = 128
    NUM_CLASSES = 128  # small stand-in for the 1000 ImageNet classes

    key = jax.random.PRNGKey(0)
    kx, k1, kb1, k2, kb2 = jax.random.split(key, 5)

    # channels-last activations at the API boundary (no wrapper transpose)
    x_nhwc = jax.random.normal(kx, (B, H, W, C), dtype=jnp.float32)
    w1 = jax.random.normal(k1, (C, HIDDEN), dtype=jnp.float32) * 0.05
    b1 = jax.random.normal(kb1, (HIDDEN,), dtype=jnp.float32) * 0.01
    w2 = jax.random.normal(k2, (HIDDEN, NUM_CLASSES), dtype=jnp.float32) * 0.05
    b2 = jax.random.normal(kb2, (NUM_CLASSES,), dtype=jnp.float32) * 0.01

    probs = classifier_forward_nhwc(x_nhwc, w1, b1, w2, b2)
    probs = jax.block_until_ready(probs)

    # sanity: shape + softmax rows sum to 1
    assert probs.shape == (B, NUM_CLASSES)
    assert jnp.allclose(jnp.sum(probs, axis=1), 1.0, atol=1e-3)

    # pure-JAX f32 reference for the same synthetic head
    x_flat = x_nhwc.reshape(B, H * W, C)
    h_ref = jnp.maximum(
        jnp.einsum("bsc,ck->bsk", x_flat, w1,
                   precision=jax.lax.Precision.HIGHEST) + b1, 0.0)
    pooled_ref = jnp.mean(h_ref, axis=1)
    logits_ref = jnp.dot(pooled_ref, w2,
                         precision=jax.lax.Precision.HIGHEST) + b2
    probs_ref = jax.nn.softmax(logits_ref, axis=1)
    assert jnp.allclose(probs, probs_ref, atol=2e-3)

    print("KERNEL_OK")
</pallas_src>

<mosaic_0001>
module attributes {stable_mosaic.version = 11 : i64} {
  func.func @backbone_pool_kernel(%arg0: i32, %arg1: i32, %arg2: memref<1x256x128xf32, #tpu.memory_space<vmem>>, %arg3: memref<128x128xbf16, #tpu.memory_space<vmem>>, %arg4: memref<1x128xf32, #tpu.memory_space<vmem>>, %arg5: memref<1x1x128xf32, #tpu.memory_space<vmem>>, %arg6: memref<8x128xf32, #tpu.memory_space<vmem>>) attributes {dimension_semantics = [#tpu.dimension_semantics<parallel>, #tpu.dimension_semantics<arbitrary>], iteration_bounds = array<i64: 2, 1>, scalar_prefetch = 0 : i64, scratch_operands = 1 : i64, tpu.core_type = #tpu.core_type<tc>, window_params = [{transform_indices = @transform_0, window_bounds = array<i64: 1, 256, 128>}, {pipeline_mode = #tpu.pipeline_mode<synchronous>, transform_indices = @transform_1, window_bounds = array<i64: 128, 128>}, {pipeline_mode = #tpu.pipeline_mode<synchronous>, transform_indices = @transform_2, window_bounds = array<i64: 1, 128>}, {transform_indices = @transform_3, window_bounds = array<i64: 1, 1, 128>}]} {
    %c0_i32 = arith.constant 0 : i32
    %0 = arith.cmpi eq, %arg1, %c0_i32 : i32
    %1 = arith.extui %0 : i1 to i32
    %c0_i32_0 = arith.constant 0 : i32
    %2 = arith.cmpi ne, %1, %c0_i32_0 : i32
    scf.if %2 {
      %cst_15 = arith.constant 0.000000e+00 : f32
      %21 = vector.broadcast %cst_15 : f32 to vector<8x128xf32>
      %c0_16 = arith.constant 0 : index
      %c0_17 = arith.constant 0 : index
      %22 = vector.load %arg6[%c0_16, %c0_17] : memref<8x128xf32, #tpu.memory_space<vmem>>, vector<8x128xf32>
      tpu.vector_store %arg6[%c0_16, %c0_17], %21 {strides = array<i32>} : memref<8x128xf32, #tpu.memory_space<vmem>>, vector<8x128xf32>,
    } else {
    }
    %c0 = arith.constant 0 : index
    %c0_1 = arith.constant 0 : index
    %c0_2 = arith.constant 0 : index
    %3 = vector.load %arg2[%c0, %c0_1, %c0_2] : memref<1x256x128xf32, #tpu.memory_space<vmem>>, vector<1x256x128xf32>
    %4 = vector.shape_cast %3 : vector<1x256x128xf32> to vector<256x128xf32>
    %5 = arith.truncf %4 : vector<256x128xf32> to vector<256x128xbf16>
    %c0_3 = arith.constant 0 : index
    %c0_4 = arith.constant 0 : index
    %6 = vector.load %arg3[%c0_3, %c0_4] : memref<128x128xbf16, #tpu.memory_space<vmem>>, vector<128x128xbf16>
    %cst = arith.constant dense<0.000000e+00> : vector<256x128xf32>
    %7 = tpu.matmul %5, %6, %cst {dimension_numbers = #tpu.dot_dimension_numbers<[1], [0], [0], [1], [0, 0, 1, 1], [], []>} : vector<256x128xbf16>, vector<128x128xbf16>, vector<256x128xf32> -> vector<256x128xf32>
    %c0_5 = arith.constant 0 : index
    %c0_6 = arith.constant 0 : index
    %8 = vector.load %arg4[%c0_5, %c0_6] : memref<1x128xf32, #tpu.memory_space<vmem>>, vector<1x128xf32>
    %9 = vector.broadcast %8 : vector<1x128xf32> to vector<256x128xf32>
    %10 = arith.addf %7, %9 : vector<256x128xf32>
    %cst_7 = arith.constant 0.000000e+00 : f32
    %11 = vector.broadcast %cst_7 : f32 to vector<256x128xf32>
    %12 = arith.maximumf %10, %11 : vector<256x128xf32>
    %c0_8 = arith.constant 0 : index
    %c0_9 = arith.constant 0 : index
    %13 = vector.load %arg6[%c0_8, %c0_9] : memref<8x128xf32, #tpu.memory_space<vmem>>, vector<8x128xf32>
    %14 = vector.shape_cast %12 : vector<256x128xf32> to vector<32x8x128xf32>
    %cst_10 = arith.constant dense<0.000000e+00> : vector<8x128xf32>
    %15 = vector.multi_reduction <add>, %14, %cst_10 [0] : vector<32x8x128xf32> to vector<8x128xf32>
    %16 = arith.addf %13, %15 : vector<8x128xf32>
    %c0_11 = arith.constant 0 : index
    %c0_12 = arith.constant 0 : index
    %17 = vector.load %arg6[%c0_11, %c0_12] : memref<8x128xf32, #tpu.memory_space<vmem>>, vector<8x128xf32>
    tpu.vector_store %arg6[%c0_11, %c0_12], %16 {strides = array<i32>} : memref<8x128xf32, #tpu.memory_space<vmem>>, vector<8x128xf32>,
    %c0_i32_13 = arith.constant 0 : i32
    %18 = arith.cmpi eq, %arg1, %c0_i32_13 : i32
    %19 = arith.extui %18 : i1 to i32
    %c0_i32_14 = arith.constant 0 : i32
    %20 = arith.cmpi ne, %19, %c0_i32_14 : i32
    scf.if %20 {
      %c0_15 = arith.constant 0 : index
      %c0_16 = arith.constant 0 : index
      %21 = vector.load %arg6[%c0_15, %c0_16] : memref<8x128xf32, #tpu.memory_space<vmem>>, vector<8x128xf32>
      %cst_17 = arith.constant dense<0.000000e+00> : vector<128xf32>
      %22 = vector.multi_reduction <add>, %21, %cst_17 [0] : vector<8x128xf32> to vector<128xf32>
      %23 = vector.shape_cast %22 : vector<128xf32> to vector<1x128xf32>
      %cst_18 = arith.constant 3.906250e-03 : f32
      %24 = vector.broadcast %cst_18 : f32 to vector<1x128xf32>
      %25 = arith.mulf %23, %24 : vector<1x128xf32>
      %c0_19 = arith.constant 0 : index
      %c0_20 = arith.constant 0 : index
      %c0_21 = arith.constant 0 : index
      %26 = vector.load %arg5[%c0_19, %c0_20, %c0_21] : memref<1x1x128xf32, #tpu.memory_space<vmem>>, vector<1x1x128xf32>
      %27 = vector.shape_cast %26 : vector<1x1x128xf32> to vector<1x128xf32>
      %28 = vector.shape_cast %25 : vector<1x128xf32> to vector<1x1x128xf32>
      tpu.vector_store %arg5[%c0_19, %c0_20, %c0_21], %28 {strides = array<i32>} : memref<1x1x128xf32, #tpu.memory_space<vmem>>, vector<1x1x128xf32>,
    } else {
    }
    return
  }
  func.func @transform_0(%arg0: i32, %arg1: i32) -> (i32, i32, i32) {
    %c0_i32 = arith.constant 0 : i32
    %c0_i32_0 = arith.constant 0 : i32
    return %arg0, %arg1, %c0_i32 : i32, i32, i32
  }
  func.func @transform_1(%arg0: i32, %arg1: i32) -> (i32, i32) {
    %c0_i32 = arith.constant 0 : i32
    %c0_i32_0 = arith.constant 0 : i32
    %c0_i32_1 = arith.constant 0 : i32
    return %c0_i32, %c0_i32_0 : i32, i32
  }
  func.func @transform_2(%arg0: i32, %arg1: i32) -> (i32, i32) {
    %c0_i32 = arith.constant 0 : i32
    %c0_i32_0 = arith.constant 0 : i32
    %c0_i32_1 = arith.constant 0 : i32
    return %c0_i32, %c0_i32_0 : i32, i32
  }
  func.func @transform_3(%arg0: i32, %arg1: i32) -> (i32, i32, i32) {
    %c0_i32 = arith.constant 0 : i32
    %c0_i32_0 = arith.constant 0 : i32
    %c0_i32_1 = arith.constant 0 : i32
    return %arg0, %c0_i32, %c0_i32_0 : i32, i32, i32
  }
}

module attributes {stable_mosaic.version = 11 : i64} {
  func.func @backbone_pool_kernel(%arg0: i32, %arg1: i32, %arg2: memref<1x256x128xf32, #tpu.memory_space<vmem>>, %arg3: memref<128x128xbf16, #tpu.memory_space<vmem>>, %arg4: memref<1x128xf32, #tpu.memory_space<vmem>>, %arg5: memref<1x1x128xf32, #tpu.memory_space<vmem>>, %arg6: memref<8x128xf32, #tpu.memory_space<vmem>>) attributes {dimension_semantics = [#tpu.dimension_semantics<parallel>, #tpu.dimension_semantics<arbitrary>], iteration_bounds = array<i64: 2, 1>, scalar_prefetch = 0 : i64, scratch_operands = 1 : i64, tpu.core_type = #tpu.core_type<tc>, window_params = [{transform_indices = @transform_0, window_bounds = array<i64: 1, 256, 128>}, {pipeline_mode = #tpu.pipeline_mode<synchronous>, transform_indices = @transform_1, window_bounds = array<i64: 128, 128>}, {pipeline_mode = #tpu.pipeline_mode<synchronous>, transform_indices = @transform_2, window_bounds = array<i64: 1, 128>}, {transform_indices = @transform_3, window_bounds = array<i64: 1, 1, 128>}]} {
    %c0_i32 = arith.constant 0 : i32
    %0 = arith.cmpi eq, %arg1, %c0_i32 : i32
    %1 = arith.extui %0 : i1 to i32
    %c0_i32_0 = arith.constant 0 : i32
    %2 = arith.cmpi ne, %1, %c0_i32_0 : i32
    scf.if %2 {
      %cst_15 = arith.constant 0.000000e+00 : f32
      %21 = vector.broadcast %cst_15 : f32 to vector<8x128xf32>
      %c0_16 = arith.constant 0 : index
      %c0_17 = arith.constant 0 : index
      %22 = vector.load %arg6[%c0_16, %c0_17] : memref<8x128xf32, #tpu.memory_space<vmem>>, vector<8x128xf32>
      tpu.vector_store %arg6[%c0_16, %c0_17], %21 {strides = array<i32>} : memref<8x128xf32, #tpu.memory_space<vmem>>, vector<8x128xf32>,
    } else {
    }
    %c0 = arith.constant 0 : index
    %c0_1 = arith.constant 0 : index
    %c0_2 = arith.constant 0 : index
    %3 = vector.load %arg2[%c0, %c0_1, %c0_2] : memref<1x256x128xf32, #tpu.memory_space<vmem>>, vector<1x256x128xf32>
    %4 = vector.shape_cast %3 : vector<1x256x128xf32> to vector<256x128xf32>
    %5 = arith.truncf %4 : vector<256x128xf32> to vector<256x128xbf16>
    %c0_3 = arith.constant 0 : index
    %c0_4 = arith.constant 0 : index
    %6 = vector.load %arg3[%c0_3, %c0_4] : memref<128x128xbf16, #tpu.memory_space<vmem>>, vector<128x128xbf16>
    %cst = arith.constant dense<0.000000e+00> : vector<256x128xf32>
    %7 = tpu.matmul %5, %6, %cst {dimension_numbers = #tpu.dot_dimension_numbers<[1], [0], [0], [1], [0, 0, 1, 1], [], []>} : vector<256x128xbf16>, vector<128x128xbf16>, vector<256x128xf32> -> vector<256x128xf32>
    %c0_5 = arith.constant 0 : index
    %c0_6 = arith.constant 0 : index
    %8 = vector.load %arg4[%c0_5, %c0_6] : memref<1x128xf32, #tpu.memory_space<vmem>>, vector<1x128xf32>
    %9 = vector.broadcast %8 : vector<1x128xf32> to vector<256x128xf32>
    %10 = arith.addf %7, %9 : vector<256x128xf32>
    %cst_7 = arith.constant 0.000000e+00 : f32
    %11 = vector.broadcast %cst_7 : f32 to vector<256x128xf32>
    %12 = arith.maximumf %10, %11 : vector<256x128xf32>
    %c0_8 = arith.constant 0 : index
    %c0_9 = arith.constant 0 : index
    %13 = vector.load %arg6[%c0_8, %c0_9] : memref<8x128xf32, #tpu.memory_space<vmem>>, vector<8x128xf32>
    %14 = vector.shape_cast %12 : vector<256x128xf32> to vector<32x8x128xf32>
    %cst_10 = arith.constant dense<0.000000e+00> : vector<8x128xf32>
    %15 = vector.multi_reduction <add>, %14, %cst_10 [0] : vector<32x8x128xf32> to vector<8x128xf32>
    %16 = arith.addf %13, %15 : vector<8x128xf32>
    %c0_11 = arith.constant 0 : index
    %c0_12 = arith.constant 0 : index
    %17 = vector.load %arg6[%c0_11, %c0_12] : memref<8x128xf32, #tpu.memory_space<vmem>>, vector<8x128xf32>
    tpu.vector_store %arg6[%c0_11, %c0_12], %16 {strides = array<i32>} : memref<8x128xf32, #tpu.memory_space<vmem>>, vector<8x128xf32>,
    %c0_i32_13 = arith.constant 0 : i32
    %18 = arith.cmpi eq, %arg1, %c0_i32_13 : i32
    %19 = arith.extui %18 : i1 to i32
    %c0_i32_14 = arith.constant 0 : i32
    %20 = arith.cmpi ne, %19, %c0_i32_14 : i32
    scf.if %20 {
      %c0_15 = arith.constant 0 : index
      %c0_16 = arith.constant 0 : index
      %21 = vector.load %arg6[%c0_15, %c0_16] : memref<8x128xf32, #tpu.memory_space<vmem>>, vector<8x128xf32>
      %cst_17 = arith.constant dense<0.000000e+00> : vector<128xf32>
      %22 = vector.multi_reduction <add>, %21, %cst_17 [0] : vector<8x128xf32> to vector<128xf32>
      %23 = vector.shape_cast %22 : vector<128xf32> to vector<1x128xf32>
      %cst_18 = arith.constant 3.906250e-03 : f32
      %24 = vector.broadcast %cst_18 : f32 to vector<1x128xf32>
      %25 = arith.mulf %23, %24 : vector<1x128xf32>
      %c0_19 = arith.constant 0 : index
      %c0_20 = arith.constant 0 : index
      %c0_21 = arith.constant 0 : index
      %26 = vector.load %arg5[%c0_19, %c0_20, %c0_21] : memref<1x1x128xf32, #tpu.memory_space<vmem>>, vector<1x1x128xf32>
      %27 = vector.shape_cast %26 : vector<1x1x128xf32> to vector<1x128xf32>
      %28 = vector.shape_cast %25 : vector<1x128xf32> to vector<1x1x128xf32>
      tpu.vector_store %arg5[%c0_19, %c0_20, %c0_21], %28 {strides = array<i32>} : memref<1x1x128xf32, #tpu.memory_space<vmem>>, vector<1x1x128xf32>,
    } else {
    }
    return
  }
  func.func @transform_0(%arg0: i32, %arg1: i32) -> (i32, i32, i32) {
    %c0_i32 = arith.constant 0 : i32
    %c0_i32_0 = arith.constant 0 : i32
    return %arg0, %arg1, %c0_i32 : i32, i32, i32
  }
  func.func @transform_1(%arg0: i32, %arg1: i32) -> (i32, i32) {
    %c0_i32 = arith.constant 0 : i32
    %c0_i32_0 = arith.constant 0 : i32
    %c0_i32_1 = arith.constant 0 : i32
    return %c0_i32, %c0_i32_0 : i32, i32
  }
  func.func @transform_2(%arg0: i32, %arg1: i32) -> (i32, i32) {
    %c0_i32 = arith.constant 0 : i32
    %c0_i32_0 = arith.constant 0 : i32
    %c0_i32_1 = arith.constant 0 : i32
    return %c0_i32, %c0_i32_0 : i32, i32
  }
  func.func @transform_3(%arg0: i32, %arg1: i32) -> (i32, i32, i32) {
    %c0_i32 = arith.constant 0 : i32
    %c0_i32_0 = arith.constant 0 : i32
    %c0_i32_1 = arith.constant 0 : i32
    return %arg0, %c0_i32, %c0_i32_0 : i32, i32, i32
  }
}

</mosaic_0001>

<llo_original>
// kernel: tpu_custom_call.1
$region0: #{tpu_custom_call.1}
  #allocation0 [shape = 'u32[]', space=smem, size = 0x4, offset = 0x4, fixed_abs, tag = 'smem constant byte address 0x4 - core index']
  #allocation1 [shape = 'u32[144,128]{1,0:T(1,128)}', space=vmem, size = 0x12000, scoped, tag = 'internal scratch']
  #allocation2 [shape = 'f32[8,128]{1,0:T(8,128)}', space=vmem, size = 0x1000, scoped, tag = 'scratch operand']
  %s0 = inlined_call_operand.hbm [shape: f32[2,256,128], index: 0, kind: input, shape index: {}]
  %s1 = inlined_call_operand.hbm [shape: bf16[128,128], index: 1, kind: input, shape index: {}]
  %s2 = inlined_call_operand.vmem [shape: f32[1,128], index: 2, kind: input, shape index: {}]
  %s3 = inlined_call_operand.hbm [shape: f32[2,1,128], index: 3, kind: output, shape index: {}]
  %s4 = sld [smem:[#allocation0]]
  $region61: #{tpu_custom_call.1} parent=0
    _
  %s6 = ssub.s32 1, %s4
  %s7 = scalar_select 0, %s6, %s4
  $region1: #{tpu_custom_call.1} parent=0
    #allocation3 [shape = 'u8[262144]{0}', space=vmem, size = 0x40000, scoped, tag = 'input window, operand 0']
    #allocation4 [shape = 's32[2]{0}', space=sflag, size = 0x8, scoped, tag = 'scoped memory for tpu_custom_call.1']
    #allocation5 [shape = 's32[2]{0}', space=sflag, size = 0x8, scoped, tag = 'scoped memory for tpu_custom_call.1']
    #allocation6 [shape = 'u8[32768]{0}', space=vmem, size = 0x8000, scoped, tag = 'input window, operand 1, single buffered']
    #allocation7 [shape = 's32[1]{0}', space=sflag, size = 0x4, scoped, tag = 'scoped memory for tpu_custom_call.1']
    #allocation8 [shape = 'u8[1024]{0}', space=vmem, size = 0x400, scoped, tag = 'output window, operand 0']
    %8 = vsyncpa [#allocation4], 0
    %s9 = scalar_lea.sflag [#allocation4], 1
    %10 = vsyncpa %s9, 0
    %11 = vsyncpa [#allocation7], 0
    %12 = vsyncpa [#allocation5], 0
    %s13 = scalar_lea.sflag [#allocation5], 1
    %14 = vsyncpa %s13, 0
    loop: start=0, step=1, limit=4
    $region2: #{tpu_custom_call.1} parent=1 // loop_pre_header
      _
    $region3: #{tpu_custom_call.1} parent=1 // loop_header
      %s16 = sphi 0, %s20
      %p17 = scmp.ge.s32.totalorder %s16, 4
      %s23 = sphi 0, %s35
      %s24 = sphi 0, %s31
      %s25 = sphi 0, %s23
      %s26 = sphi 0, %s24
      %s27 = sphi 0, %s25
      %s28 = sphi 0, %s26
      %s40 = sphi 0, %s42
      %s43 = sphi 0, %s40
      %s44 = sphi 0, %s43
      %s60 = sphi 0, %s44
      %s64 = sphi 0, %s64
      %s66 = sphi 0, %s64
      %s67 = sphi 0, %s66
      %s81 = sphi 0, %s67
      %s85 = sphi 0, %s85
      %s87 = sphi 0, %s85
      %s88 = sphi 0, %s87
      %s102 = sphi 0, %s88
      %s108 = sphi 0, %s110
      %s111 = sphi 0, %s108
      %s112 = sphi 0, %s111
      %s128 = sphi 0, %s112
    $region4: #{tpu_custom_call.1} parent=1 // loop_header_branch
      %19 = sbr.rel (%p17) target = $region8
    $region5: #{tpu_custom_call.1} parent=1 // loop_body
      %s21 = ssub.s32 %s16, 1
      %s22 = ssub.s32 %s16, 2
      %s29 = sadd.s32 1, %s24
      %p30 = scmp.ge.s32.totalorder %s29, 1
      %s31 = scalar_select %p30, 0, %s29
      %s32 = sadd.s32 1, %s23
      %s33 = scalar_select %p30, %s32, %s23
      %p34 = scmp.ge.s32.totalorder %s33, 2
      %s35 = scalar_select %p34, 0, %s33
      %s36 = ssub.s32 %s23, %s35
      %s37 = ssub.s32 %s24, %s31
      %s38 = sor.u32 %s36, %s37
      %p39 = scmp.eq.s32.totalorder %s38, 0
      %s41 = sadd.s32 %s40, 1
      %s42 = scalar_select %p39, %s40, %s41
      %p45 = pneg %p39
      %p46 = scmp.eq.s32.totalorder %s16, 1
      %p47 = por %p45, %p46
      %p48 = scmp.ne.s32.totalorder %s40, %s43
      %p49 = scmp.eq.s32.totalorder %s16, 0
      %p50 = por %p48, %p49
      %p51 = scmp.ne.s32.totalorder %s40, %s43
      %p52 = scmp.eq.s32.totalorder %s21, 1
      %p53 = por %p51, %p52
      %p54 = scmp.ne.s32.totalorder %s43, %s44
      %p55 = scmp.eq.s32.totalorder %s21, 0
      %p56 = por %p54, %p55
      %p57 = scmp.ne.s32.totalorder %s43, %s44
      %p58 = scmp.eq.s32.totalorder %s22, 1
      %p59 = por %p57, %p58
      %p61 = scmp.ne.s32.totalorder %s44, %s60
      %p62 = scmp.eq.s32.totalorder %s22, 0
      %p63 = por %p61, %p62
      %s65 = sadd.s32 %s64, 1
      %p68 = scmp.eq.s32.totalorder %s16, 1
      %p69 = scmp.ne.s32.totalorder %s64, %s66
      %p70 = scmp.eq.s32.totalorder %s16, 0
      %p71 = por %p69, %p70
      %p72 = scmp.ne.s32.totalorder %s64, %s66
      %p73 = scmp.eq.s32.totalorder %s21, 1
      %p74 = por %p72, %p73
      %p75 = scmp.ne.s32.totalorder %s66, %s67
      %p76 = scmp.eq.s32.totalorder %s21, 0
      %p77 = por %p75, %p76
      %p78 = scmp.ne.s32.totalorder %s66, %s67
      %p79 = scmp.eq.s32.totalorder %s22, 1
      %p80 = por %p78, %p79
      %p82 = scmp.ne.s32.totalorder %s67, %s81
      %p83 = scmp.eq.s32.totalorder %s22, 0
      %p84 = por %p82, %p83
      %s86 = sadd.s32 %s85, 1
      %p89 = scmp.eq.s32.totalorder %s16, 1
      %p90 = scmp.ne.s32.totalorder %s85, %s87
      %p91 = scmp.eq.s32.totalorder %s16, 0
      %p92 = por %p90, %p91
      %p93 = scmp.ne.s32.totalorder %s85, %s87
      %p94 = scmp.eq.s32.totalorder %s21, 1
      %p95 = por %p93, %p94
      %p96 = scmp.ne.s32.totalorder %s87, %s88
      %p97 = scmp.eq.s32.totalorder %s21, 0
      %p98 = por %p96, %p97
      %p99 = scmp.ne.s32.totalorder %s87, %s88
      %p100 = scmp.eq.s32.totalorder %s22, 1
      %p101 = por %p99, %p100
      %p103 = scmp.ne.s32.totalorder %s88, %s102
      %p104 = scmp.eq.s32.totalorder %s22, 0
      %p105 = por %p103, %p104
      %s106 = ssub.s32 %s23, %s35
      %p107 = scmp.eq.s32.totalorder %s106, 0
      %s109 = sadd.s32 %s108, 1
      %s110 = scalar_select %p107, %s108, %s109
      %p113 = pneg %p107
      %p114 = scmp.eq.s32.totalorder %s16, 1
      %p115 = por %p113, %p114
      %p116 = scmp.ne.s32.totalorder %s108, %s111
      %p117 = scmp.eq.s32.totalorder %s16, 0
      %p118 = por %p116, %p117
      %p119 = scmp.ne.s32.totalorder %s108, %s111
      %p120 = scmp.eq.s32.totalorder %s21, 1
      %p121 = por %p119, %p120
      %p122 = scmp.ne.s32.totalorder %s111, %s112
      %p123 = scmp.eq.s32.totalorder %s21, 0
      %p124 = por %p122, %p123
      %p125 = scmp.ne.s32.totalorder %s111, %s112
      %p126 = scmp.eq.s32.totalorder %s22, 1
      %p127 = por %p125, %p126
      %p129 = scmp.ne.s32.totalorder %s112, %s128
      %p130 = scmp.eq.s32.totalorder %s22, 0
      %p131 = por %p129, %p130
      %p132 = scmp.le.s32.totalorder 1, %s16
      %p133 = scmp.lt.s32.totalorder %s16, 3
      %p134 = pnand %p132, %p133
      %p135 = pneg %p134
      // Predicated region
      $region9: #{tpu_custom_call.1} parent=5 // pred_check
        _
      $region10: #{tpu_custom_call.1} parent=5 // pred_check_branch
        %137 = sbr.rel (%p134) target = $region12
      $region11: #{tpu_custom_call.1} parent=5 // pred_region
        %s138 = ssub.s32 %s16, 1
        // Predicated region
        $region13: #{tpu_custom_call.1} parent=11 // pred_check
          %p139 = pneg %p77
        $region14: #{tpu_custom_call.1} parent=11 // pred_check_branch
          %141 = sbr.rel (%p139) target = $region16
        $region15: #{tpu_custom_call.1} parent=11 // pred_region
          %s143 = ssub.s32 1024, 1024
          %144 = vsyncadd [#allocation7], %s143
          %s145 = sshll.u32 [#allocation6], 4
          %s146 = int_to_ptr.vmem [resolvable:$true] %s145
          %151 = dma.hbm_to_vmem [thread:$0]  %s1, 1024, %s146, [#allocation7], 64, 64, 4
        $region16: #{tpu_custom_call.1} parent=11 // pred_fallthru
          _
        // Predicated region
        $region17: #{tpu_custom_call.1} parent=11 // pred_check
          %p152 = pneg %p98
        $region18: #{tpu_custom_call.1} parent=11 // pred_check_branch
          %154 = sbr.rel (%p152) target = $region20
        $region19: #{tpu_custom_call.1} parent=11 // pred_region
          _
        $region20: #{tpu_custom_call.1} parent=11 // pred_fallthru
          _
      $region12: #{tpu_custom_call.1} parent=5 // pred_fallthru
        _
      %p155 = scmp.lt.s32.totalorder %s16, 2
      // Predicated region
      $region21: #{tpu_custom_call.1} parent=5 // pred_check
        %p156 = pneg %p155
      $region22: #{tpu_custom_call.1} parent=5 // pred_check_branch
        %158 = sbr.rel (%p156) target = $region24
      $region23: #{tpu_custom_call.1} parent=5 // pred_region
        // Predicated region
        $region25: #{tpu_custom_call.1} parent=23 // pred_check
          %p159 = pneg %p50
        $region26: #{tpu_custom_call.1} parent=23 // pred_check_branch
          %161 = sbr.rel (%p159) target = $region28
        $region27: #{tpu_custom_call.1} parent=23 // pred_region
          %s162 = sand.u32 %s40, 1
          %s163 = scalar_lea.sflag [#allocation4], %s162
          %s164 = sand.u32 %s40, 1
          %s165 = smul.addr %s164, 256
          %s166 = scalar_lea.vmem [#allocation3], %s165
          %s167 = smul.u32 32, %s24
          %s169 = ssub.s32 4096, 4096
          %170 = vsyncadd %s163, %s169
          %s171 = smul.addr %s23, 32
          %s172 = sadd.s32 %s167, %s171
          %s173 = smul.addr %s172, 128
          %s174 = scalar_lea.hbm %s0, %s173
          %s175 = sshll.u32 %s166, 4
          %s176 = int_to_ptr.vmem [resolvable:$true] %s175
          %181 = dma.hbm_to_vmem [thread:$0]  %s174, 4096, %s176, %s163, 128, 128, 8
        $region28: #{tpu_custom_call.1} parent=23 // pred_fallthru
          _
      $region24: #{tpu_custom_call.1} parent=5 // pred_fallthru
        _
      %p182 = scmp.le.s32.totalorder 1, %s16
      %p183 = scmp.lt.s32.totalorder %s16, 3
      %p184 = pnand %p182, %p183
      %p185 = pneg %p184
      // Predicated region
      $region29: #{tpu_custom_call.1} parent=5 // pred_check
        _
      $region30: #{tpu_custom_call.1} parent=5 // pred_check_branch
        %187 = sbr.rel (%p184) target = $region32
      $region31: #{tpu_custom_call.1} parent=5 // pred_region
        %s188 = ssub.s32 %s16, 1
        %s189 = sand.u32 %s43, 1
        %s190 = scalar_lea.sflag [#allocation4], %s189
        %s191 = sand.u32 %s43, 1
        %s192 = smul.addr %s191, 256
        %s193 = scalar_lea.vmem [#allocation3], %s192
        // Predicated region
        $region33: #{tpu_custom_call.1} parent=31 // pred_check
          %p194 = pneg %p56
        $region34: #{tpu_custom_call.1} parent=31 // pred_check_branch
          %196 = sbr.rel (%p194) target = $region36
        $region35: #{tpu_custom_call.1} parent=31 // pred_region
          %197 = dma.done %s190, 4096
        $region36: #{tpu_custom_call.1} parent=31 // pred_fallthru
          _
        // Predicated region
        $region37: #{tpu_custom_call.1} parent=31 // pred_check
          %p198 = pneg %p77
        $region38: #{tpu_custom_call.1} parent=31 // pred_check_branch
          %200 = sbr.rel (%p198) target = $region40
        $region39: #{tpu_custom_call.1} parent=31 // pred_region
          %201 = dma.done [#allocation7], 1024
        $region40: #{tpu_custom_call.1} parent=31 // pred_fallthru
          _
        %s202 = sand.u32 %s43, 1
        %s203 = scalar_lea.sflag [#allocation4], %s202
        %s204 = sand.u32 %s43, 1
        %s205 = smul.addr %s204, 256
        %s206 = scalar_lea.vmem [#allocation3], %s205
        %p207 = pneg %p56
        %p208 = pneg %p53
        %p209 = pneg %p77
        %p210 = pneg %p74
        %p211 = pneg %p98
        %p212 = pneg %p95
        %p213 = pneg %p124
        %p214 = pneg %p121
        %s215 = sand.u32 %s111, 1
        %s216 = scalar_lea.sflag [#allocation5], %s215
        %s217 = sand.u32 %s111, 1
        %s218 = scalar_lea.vmem [#allocation8], %s217
        %s219 = smul.u32 32, %s26
        %p221 = scmp.eq.s32.totalorder %s26, 0
        // Predicated region
        $region41: #{tpu_custom_call.1} parent=31 // pred_check
          %p222 = pneg %p221
        $region42: #{tpu_custom_call.1} parent=31 // pred_check_branch
          %224 = sbr.rel (%p222) target = $region44
        $region43: #{tpu_custom_call.1} parent=31 // pred_region
          %225 = vst [vmem:[#allocation2] sm:$0xff] 0.0
        $region44: #{tpu_custom_call.1} parent=31 // pred_fallthru
          _
        %v226 = vld [vmem:[%s193] sm:$0xff]
        %v227 = vld [vmem:[%s193 + $0x8] sm:$0xff]
        %v228 = vld [vmem:[%s193 + $0x10] sm:$0xff]
        %v229 = vld [vmem:[%s193 + $0x18] sm:$0xff]
        %v230 = vld [vmem:[%s193 + $0x20] sm:$0xff]
        %v231 = vld [vmem:[%s193 + $0x28] sm:$0xff]
        %v232 = vld [vmem:[%s193 + $0x30] sm:$0xff]
        %v233 = vld [vmem:[%s193 + $0x38] sm:$0xff]
        %v234 = vld [vmem:[%s193 + $0x40] sm:$0xff]
        %v235 = vld [vmem:[%s193 + $0x48] sm:$0xff]
        %v236 = vld [vmem:[%s193 + $0x50] sm:$0xff]
        %v237 = vld [vmem:[%s193 + $0x58] sm:$0xff]
        %v238 = vld [vmem:[%s193 + $0x60] sm:$0xff]
        %v239 = vld [vmem:[%s193 + $0x68] sm:$0xff]
        %v240 = vld [vmem:[%s193 + $0x70] sm:$0xff]
        %v241 = vld [vmem:[%s193 + $0x78] sm:$0xff]
        %v242 = vld [vmem:[%s193 + $0x80] sm:$0xff]
        %v243 = vld [vmem:[%s193 + $0x88] sm:$0xff]
        %v244 = vld [vmem:[%s193 + $0x90] sm:$0xff]
        %v245 = vld [vmem:[%s193 + $0x98] sm:$0xff]
        %v246 = vld [vmem:[%s193 + $0xa0] sm:$0xff]
        %v247 = vld [vmem:[%s193 + $0xa8] sm:$0xff]
        %v248 = vld [vmem:[%s193 + $0xb0] sm:$0xff]
        %v249 = vld [vmem:[%s193 + $0xb8] sm:$0xff]
        %v250 = vld [vmem:[%s193 + $0xc0] sm:$0xff]
        %v251 = vld [vmem:[%s193 + $0xc8] sm:$0xff]
        %v252 = vld [vmem:[%s193 + $0xd0] sm:$0xff]
        %v253 = vld [vmem:[%s193 + $0xd8] sm:$0xff]
        %v254 = vld [vmem:[%s193 + $0xe0] sm:$0xff]
        %v255 = vld [vmem:[%s193 + $0xe8] sm:$0xff]
        %v256 = vld [vmem:[%s193 + $0xf0] sm:$0xff]
        %v257 = vld [vmem:[%s193 + $0xf8] sm:$0xff]
        %v258 = vpack.c.bf16 %v227, %v226
        %v259 = vpack.c.bf16 %v229, %v228
        %v260 = vpack.c.bf16 %v231, %v230
        %v261 = vpack.c.bf16 %v233, %v232
        %v262 = vpack.c.bf16 %v235, %v234
        %v263 = vpack.c.bf16 %v237, %v236
        %v264 = vpack.c.bf16 %v239, %v238
        %v265 = vpack.c.bf16 %v241, %v240
        %v266 = vpack.c.bf16 %v243, %v242
        %v267 = vpack.c.bf16 %v245, %v244
        %v268 = vpack.c.bf16 %v247, %v246
        %v269 = vpack.c.bf16 %v249, %v248
        %v270 = vpack.c.bf16 %v251, %v250
        %v271 = vpack.c.bf16 %v253, %v252
        %v272 = vpack.c.bf16 %v255, %v254
        %v273 = vpack.c.bf16 %v257, %v256
        %v274 = vld [vmem:[#allocation6] sm:$0xf]
        %v275 = vld [vmem:[#allocation6 + $0x4] sm:$0xf]
        %v276 = vld [vmem:[#allocation6 + $0x8] sm:$0xf]
        %v277 = vld [vmem:[#allocation6 + $0xc] sm:$0xf]
        %v278 = vld [vmem:[#allocation6 + $0x10] sm:$0xf]
        %v279 = vld [vmem:[#allocation6 + $0x14] sm:$0xf]
        %v280 = vld [vmem:[#allocation6 + $0x18] sm:$0xf]
        %v281 = vld [vmem:[#allocation6 + $0x1c] sm:$0xf]
        %v282 = vld [vmem:[#allocation6 + $0x20] sm:$0xf]
        %v283 = vld [vmem:[#allocation6 + $0x24] sm:$0xf]
        %v284 = vld [vmem:[#allocation6 + $0x28] sm:$0xf]
        %v285 = vld [vmem:[#allocation6 + $0x2c] sm:$0xf]
        %v286 = vld [vmem:[#allocation6 + $0x30] sm:$0xf]
        %v287 = vld [vmem:[#allocation6 + $0x34] sm:$0xf]
        %v288 = vld [vmem:[#allocation6 + $0x38] sm:$0xf]
        %v289 = vld [vmem:[#allocation6 + $0x3c] sm:$0xf]
        %v290 = vld [vmem:[%s2] sm:$0x1]
        %v292 = vlaneseq
        %v293 = vshrl.u32 %v292, 7
        %v294 = vsub.s32 0, %v293
        %v295 = vrot.slane %v290, %v294
        %v313 = vunpack.c.l.b16 %v274
        %v314 = vunpack.c.l.b16 %v275
        %v315 = vunpack.c.l.b16 %v276
        %v316 = vunpack.c.l.b16 %v277
        %v317 = vunpack.c.l.b16 %v278
        %v318 = vunpack.c.l.b16 %v279
        %v319 = vunpack.c.l.b16 %v280
        %v320 = vunpack.c.l.b16 %v281
        %v321 = vunpack.c.l.b16 %v282
        %v322 = vunpack.c.l.b16 %v283
        %v323 = vunpack.c.l.b16 %v284
        %v324 = vunpack.c.l.b16 %v285
        %v325 = vunpack.c.l.b16 %v286
        %v326 = vunpack.c.l.b16 %v287
        %v327 = vunpack.c.l.b16 %v288
        %v328 = vunpack.c.l.b16 %v289
        %v329 = vpack.c.b16 %v314, %v313
        %v330 = vpack.c.b16 %v316, %v315
        %v331 = vpack.c.b16 %v318, %v317
        %v332 = vpack.c.b16 %v320, %v319
        %v333 = vpack.c.b16 %v322, %v321
        %v334 = vpack.c.b16 %v324, %v323
        %v335 = vpack.c.b16 %v326, %v325
        %v336 = vpack.c.b16 %v328, %v327
        %345 = vmatprep.subr.bf16.mxu0 0
        %346 = vmatpush1.bf16.msra.mxu0 %v329
        %347 = vmatprep.subr.bf16.mxu0 0
        %348 = vmatpush1.bf16.msra.mxu0 %v330
        %349 = vmatprep.subr.bf16.mxu0 0
        %350 = vmatpush1.bf16.msra.mxu0 %v331
        %351 = vmatprep.subr.bf16.mxu0 0
        %352 = vmatpush1.bf16.msra.mxu0 %v332
        %353 = vmatprep.subr.bf16.mxu0 0
        %354 = vmatpush1.bf16.msra.mxu0 %v333
        %355 = vmatprep.subr.bf16.mxu0 0
        %356 = vmatpush1.bf16.msra.mxu0 %v334
        %357 = vmatprep.subr.bf16.mxu0 0
        %358 = vmatpush1.bf16.msra.mxu0 %v335
        %359 = vmatprep.subr.bf16.mxu0 0
        %360 = vmatpush1.bf16.msra.mxu0 %v336
        %361 = vmatprep.subr.bf16.mxu0 0
        %362 = vmatpush1.bf16.msra.mxu0 0
        %363 = vmatprep.subr.bf16.mxu0 0
        %364 = vmatpush1.bf16.msra.mxu0 0
        %365 = vmatprep.subr.bf16.mxu0 0
        %366 = vmatpush1.bf16.msra.mxu0 0
        %367 = vmatprep.subr.bf16.mxu0 0
        %368 = vmatpush1.bf16.msra.mxu0 0
        %369 = vmatprep.subr.bf16.mxu0 0
        %370 = vmatpush1.bf16.msra.mxu0 0
        %371 = vmatprep.subr.bf16.mxu0 0
        %372 = vmatpush1.bf16.msra.mxu0 0
        %373 = vmatprep.subr.bf16.mxu0 0
        %374 = vmatpush1.bf16.msra.mxu0 0
        %375 = vmatprep.subr.bf16.mxu0 0
        %376 = vmatpush1.bf16.msra.mxu0 0
        %377 = vmatprep.mubr.bf16.mxu0 0
        %378 = vmatmul.mubr.bf16.gmra.mrb[0].mxu0 %v258
        %v379 = vpop.f32.mrb[0].mxu0
        %v380 = vadd.f32 %v295, %v379
        %v381 = vpop.f32.mrb[0].mxu0
        %v382 = vpop.f32.mrb[0].mxu0
        %v383 = vadd.f32 %v295, %v382
        %v384 = vpop.f32.mrb[0].mxu0
        %385 = vmatprep.mubr.bf16.mxu0 0
        %386 = vmatmul.mubr.bf16.gmra.mrb[0].mxu0 %v259
        %v387 = vpop.f32.mrb[0].mxu0
        %v388 = vadd.f32 %v295, %v387
        %v389 = vpop.f32.mrb[0].mxu0
        %v390 = vpop.f32.mrb[0].mxu0
        %v391 = vadd.f32 %v295, %v390
        %v392 = vpop.f32.mrb[0].mxu0
        %393 = vmatprep.mubr.bf16.mxu0 0
        %394 = vmatmul.mubr.bf16.gmra.mrb[0].mxu0 %v260
        %v395 = vpop.f32.mrb[0].mxu0
        %v396 = vadd.f32 %v295, %v395
        %v397 = vpop.f32.mrb[0].mxu0
        %v398 = vpop.f32.mrb[0].mxu0
        %v399 = vadd.f32 %v295, %v398
        %v400 = vpop.f32.mrb[0].mxu0
        %401 = vmatprep.mubr.bf16.mxu0 0
        %402 = vmatmul.mubr.bf16.gmra.mrb[0].mxu0 %v261
        %v403 = vpop.f32.mrb[0].mxu0
        %v404 = vadd.f32 %v295, %v403
        %v405 = vpop.f32.mrb[0].mxu0
        %v406 = vpop.f32.mrb[0].mxu0
        %v407 = vadd.f32 %v295, %v406
        %v408 = vpop.f32.mrb[0].mxu0
        %409 = vmatprep.mubr.bf16.mxu0 0
        %410 = vmatmul.mubr.bf16.gmra.mrb[0].mxu0 %v262
        %v411 = vpop.f32.mrb[0].mxu0
        %v412 = vadd.f32 %v295, %v411
        %v413 = vpop.f32.mrb[0].mxu0
        %v414 = vpop.f32.mrb[0].mxu0
        %v415 = vadd.f32 %v295, %v414
        %v416 = vpop.f32.mrb[0].mxu0
        %417 = vmatprep.mubr.bf16.mxu0 0
        %418 = vmatmul.mubr.bf16.gmra.mrb[0].mxu0 %v263
        %v419 = vpop.f32.mrb[0].mxu0
        %v420 = vadd.f32 %v295, %v419
        %v421 = vpop.f32.mrb[0].mxu0
        %v422 = vpop.f32.mrb[0].mxu0
        %v423 = vadd.f32 %v295, %v422
        %v424 = vpop.f32.mrb[0].mxu0
        %425 = vmatprep.mubr.bf16.mxu0 0
        %426 = vmatmul.mubr.bf16.gmra.mrb[0].mxu0 %v264
        %v427 = vpop.f32.mrb[0].mxu0
        %v428 = vadd.f32 %v295, %v427
        %v429 = vpop.f32.mrb[0].mxu0
        %v430 = vpop.f32.mrb[0].mxu0
        %v431 = vadd.f32 %v295, %v430
        %v432 = vpop.f32.mrb[0].mxu0
        %433 = vmatprep.mubr.bf16.mxu0 0
        %434 = vmatmul.mubr.bf16.gmra.mrb[0].mxu0 %v265
        %v435 = vpop.f32.mrb[0].mxu0
        %v436 = vadd.f32 %v295, %v435
        %v437 = vpop.f32.mrb[0].mxu0
        %v438 = vpop.f32.mrb[0].mxu0
        %v439 = vadd.f32 %v295, %v438
        %v440 = vpop.f32.mrb[0].mxu0
        %441 = vmatprep.mubr.bf16.mxu0 0
        %442 = vmatmul.mubr.bf16.gmra.mrb[0].mxu0 %v266
        %v443 = vpop.f32.mrb[0].mxu0
        %v444 = vadd.f32 %v295, %v443
        %v445 = vpop.f32.mrb[0].mxu0
        %v446 = vpop.f32.mrb[0].mxu0
        %v447 = vadd.f32 %v295, %v446
        %v448 = vpop.f32.mrb[0].mxu0
        %449 = vmatprep.mubr.bf16.mxu0 0
        %450 = vmatmul.mubr.bf16.gmra.mrb[0].mxu0 %v267
        %v451 = vpop.f32.mrb[0].mxu0
        %v452 = vadd.f32 %v295, %v451
        %v453 = vpop.f32.mrb[0].mxu0
        %v454 = vpop.f32.mrb[0].mxu0
        %v455 = vadd.f32 %v295, %v454
        %v456 = vpop.f32.mrb[0].mxu0
        %457 = vmatprep.mubr.bf16.mxu0 0
        %458 = vmatmul.mubr.bf16.gmra.mrb[0].mxu0 %v268
        %v459 = vpop.f32.mrb[0].mxu0
        %v460 = vadd.f32 %v295, %v459
        %v461 = vpop.f32.mrb[0].mxu0
        %v462 = vpop.f32.mrb[0].mxu0
        %v463 = vadd.f32 %v295, %v462
        %v464 = vpop.f32.mrb[0].mxu0
        %465 = vmatprep.mubr.bf16.mxu0 0
        %466 = vmatmul.mubr.bf16.gmra.mrb[0].mxu0 %v269
        %v467 = vpop.f32.mrb[0].mxu0
        %v468 = vadd.f32 %v295, %v467
        %v469 = vpop.f32.mrb[0].mxu0
        %v470 = vpop.f32.mrb[0].mxu0
        %v471 = vadd.f32 %v295, %v470
        %v472 = vpop.f32.mrb[0].mxu0
        %473 = vmatprep.mubr.bf16.mxu0 0
        %474 = vmatmul.mubr.bf16.gmra.mrb[0].mxu0 %v270
        %v475 = vpop.f32.mrb[0].mxu0
        %v476 = vadd.f32 %v295, %v475
        %v477 = vpop.f32.mrb[0].mxu0
        %v478 = vpop.f32.mrb[0].mxu0
        %v479 = vadd.f32 %v295, %v478
        %v480 = vpop.f32.mrb[0].mxu0
        %481 = vmatprep.mubr.bf16.mxu0 0
        %482 = vmatmul.mubr.bf16.gmra.mrb[0].mxu0 %v271
        %v483 = vpop.f32.mrb[0].mxu0
        %v484 = vadd.f32 %v295, %v483
        %v485 = vpop.f32.mrb[0].mxu0
        %v486 = vpop.f32.mrb[0].mxu0
        %v487 = vadd.f32 %v295, %v486
        %v488 = vpop.f32.mrb[0].mxu0
        %489 = vmatprep.mubr.bf16.mxu0 0
        %490 = vmatmul.mubr.bf16.gmra.mrb[0].mxu0 %v272
        %v491 = vpop.f32.mrb[0].mxu0
        %v492 = vadd.f32 %v295, %v491
        %v493 = vpop.f32.mrb[0].mxu0
        %v494 = vpop.f32.mrb[0].mxu0
        %v495 = vadd.f32 %v295, %v494
        %v496 = vpop.f32.mrb[0].mxu0
        %497 = vmatprep.mubr.bf16.mxu0 0
        %498 = vmatmul.mubr.bf16.gmra.mrb[0].mxu0 %v273
        %v499 = vpop.f32.mrb[0].mxu0
        %v500 = vadd.f32 %v295, %v499
        %v501 = vpop.f32.mrb[0].mxu0
        %v502 = vpop.f32.mrb[0].mxu0
        %v503 = vadd.f32 %v295, %v502
        %v504 = vpop.f32.mrb[0].mxu0
        %505 = vdwg.mxu0
        %v506 = vmax.f32 %v380, 0.0
        %v507 = vmax.f32 %v383, 0.0
        %v508 = vmax.f32 %v388, 0.0
        %v509 = vmax.f32 %v391, 0.0
        %v510 = vmax.f32 %v396, 0.0
        %v511 = vmax.f32 %v399, 0.0
        %v512 = vmax.f32 %v404, 0.0
        %v513 = vmax.f32 %v407, 0.0
        %v514 = vmax.f32 %v412, 0.0
        %v515 = vmax.f32 %v415, 0.0
        %v516 = vmax.f32 %v420, 0.0
        %v517 = vmax.f32 %v423, 0.0
        %v518 = vmax.f32 %v428, 0.0
        %v519 = vmax.f32 %v431, 0.0
        %v520 = vmax.f32 %v436, 0.0
        %v521 = vmax.f32 %v439, 0.0
        %v522 = vmax.f32 %v444, 0.0
        %v523 = vmax.f32 %v447, 0.0
        %v524 = vmax.f32 %v452, 0.0
        %v525 = vmax.f32 %v455, 0.0
        %v526 = vmax.f32 %v460, 0.0
        %v527 = vmax.f32 %v463, 0.0
        %v528 = vmax.f32 %v468, 0.0
        %v529 = vmax.f32 %v471, 0.0
        %v530 = vmax.f32 %v476, 0.0
        %v531 = vmax.f32 %v479, 0.0
        %v532 = vmax.f32 %v484, 0.0
        %v533 = vmax.f32 %v487, 0.0
        %v534 = vmax.f32 %v492, 0.0
        %v535 = vmax.f32 %v495, 0.0
        %v536 = vmax.f32 %v500, 0.0
        %v537 = vmax.f32 %v503, 0.0
        %v538 = vld [vmem:[#allocation2] sm:$0xff]
        %v539 = vadd.f32 %v506, %v507
        %v540 = vadd.f32 %v539, %v508
        %v541 = vadd.f32 %v540, %v509
        %v542 = vadd.f32 %v541, %v510
        %v543 = vadd.f32 %v542, %v511
        %v544 = vadd.f32 %v543, %v512
        %v545 = vadd.f32 %v544, %v513
        %v546 = vadd.f32 %v545, %v514
        %v547 = vadd.f32 %v546, %v515
        %v548 = vadd.f32 %v547, %v516
        %v549 = vadd.f32 %v548, %v517
        %v550 = vadd.f32 %v549, %v518
        %v551 = vadd.f32 %v550, %v519
        %v552 = vadd.f32 %v551, %v520
        %v553 = vadd.f32 %v552, %v521
        %v554 = vadd.f32 %v553, %v522
        %v555 = vadd.f32 %v554, %v523
        %v556 = vadd.f32 %v555, %v524
        %v557 = vadd.f32 %v556, %v525
        %v558 = vadd.f32 %v557, %v526
        %v559 = vadd.f32 %v558, %v527
        %v560 = vadd.f32 %v559, %v528
        %v561 = vadd.f32 %v560, %v529
        %v562 = vadd.f32 %v561, %v530
        %v563 = vadd.f32 %v562, %v531
        %v564 = vadd.f32 %v563, %v532
        %v565 = vadd.f32 %v564, %v533
        %v566 = vadd.f32 %v565, %v534
        %v567 = vadd.f32 %v566, %v535
        %v568 = vadd.f32 %v567, %v536
        %v569 = vadd.f32 %v568, %v537
        %v570 = vadd.f32 %v538, %v569
        %571 = vst [vmem:[#allocation2] sm:$0xff] %v570
        // Predicated region
        $region45: #{tpu_custom_call.1} parent=31 // pred_check
          %p572 = pneg %p221
        $region46: #{tpu_custom_call.1} parent=31 // pred_check_branch
          %574 = sbr.rel (%p572) target = $region48
        $region47: #{tpu_custom_call.1} parent=31 // pred_region
          %v575 = vld [vmem:[#allocation2] sm:$0xff]
          %v576 = vrot.slane %v575, 4
          %v577 = vadd.f32 %v575, %v576
          %v578 = vrot.slane %v577, 2
          %v579 = vadd.f32 %v577, %v578
          %v580 = vrot.slane %v579, 1
          %v581 = vadd.f32 %v579, %v580
          %v582 = vmul.f32 %v581, 0.00390625
          %583 = vst [vmem:[%s218] sm:$0x1] %v582
        $region48: #{tpu_custom_call.1} parent=31 // pred_fallthru
          _
        %s584 = sand.u32 %s111, 1
        %s585 = scalar_lea.sflag [#allocation5], %s584
        %s586 = sand.u32 %s111, 1
        %s587 = scalar_lea.vmem [#allocation8], %s586
        // Predicated region
        $region49: #{tpu_custom_call.1} parent=31 // pred_check
          %p588 = pneg %p121
        $region50: #{tpu_custom_call.1} parent=31 // pred_check_branch
          %590 = sbr.rel (%p588) target = $region52
        $region51: #{tpu_custom_call.1} parent=31 // pred_region
          %s592 = ssub.s32 16, 16
          %593 = vsyncadd %s585, %s592
          %s594 = smul.addr %s25, 16
          %s595 = scalar_lea.hbm %s3, %s594
          %s597 = sshll.u32 %s587, 4
          %s598 = int_to_ptr.vmem [resolvable:$true] %s597
          %600 = dma.vmem_to_hbm [thread:$0]  %s598, 16, %s595, %s585
        $region52: #{tpu_custom_call.1} parent=31 // pred_fallthru
          _
      $region32: #{tpu_custom_call.1} parent=5 // pred_fallthru
        _
      %p601 = scmp.le.s32.totalorder 2, %s16
      // Predicated region
      $region53: #{tpu_custom_call.1} parent=5 // pred_check
        %p602 = pneg %p601
      $region54: #{tpu_custom_call.1} parent=5 // pred_check_branch
        %604 = sbr.rel (%p602) target = $region56
      $region55: #{tpu_custom_call.1} parent=5 // pred_region
        %s605 = ssub.s32 %s16, 2
        // Predicated region
        $region57: #{tpu_custom_call.1} parent=55 // pred_check
          %p606 = pneg %p127
        $region58: #{tpu_custom_call.1} parent=55 // pred_check_branch
          %608 = sbr.rel (%p606) target = $region60
        $region59: #{tpu_custom_call.1} parent=55 // pred_region
          %s609 = sand.u32 %s112, 1
          %s610 = scalar_lea.sflag [#allocation5], %s609
          %s611 = sand.u32 %s112, 1
          %s612 = scalar_lea.vmem [#allocation8], %s611
          %613 = dma.done %s610, 16
        $region60: #{tpu_custom_call.1} parent=55 // pred_fallthru
          _
      $region56: #{tpu_custom_call.1} parent=5 // pred_fallthru
        _
    $region6: #{tpu_custom_call.1} parent=1 // loop_footer
      %s20 = sadd.s32 1, %s16
    $region7: #{tpu_custom_call.1} parent=1 // loop_footer_branch
      %15 = sbr.rel target = $region3
    $region8: #{tpu_custom_call.1} parent=1 // loop_exit
      _
    %614 = vsyncpa [#allocation4], 1
    %s615 = scalar_lea.sflag [#allocation4], 1
    %616 = vsyncpa %s615, 1
    %617 = vsyncpa [#allocation7], 1
    %618 = vsyncpa [#allocation5], 1
    %s619 = scalar_lea.sflag [#allocation5], 1
    %620 = vsyncpa %s619, 1

// kernel: tpu_custom_call.1
$region0: #{tpu_custom_call.1}
  #allocation0 [shape = 'u32[]', space=smem, size = 0x4, offset = 0x4, fixed_abs, tag = 'smem constant byte address 0x4 - core index']
  #allocation1 [shape = 'u32[144,128]{1,0:T(1,128)}', space=vmem, size = 0x12000, scoped, tag = 'internal scratch']
  #allocation2 [shape = 'f32[8,128]{1,0:T(8,128)}', space=vmem, size = 0x1000, scoped, tag = 'scratch operand']
  %s0 = inlined_call_operand.hbm [shape: f32[2,256,128], index: 0, kind: input, shape index: {}]
  %s1 = inlined_call_operand.hbm [shape: bf16[128,128], index: 1, kind: input, shape index: {}]
  %s2 = inlined_call_operand.vmem [shape: f32[1,128], index: 2, kind: input, shape index: {}]
  %s3 = inlined_call_operand.hbm [shape: f32[2,1,128], index: 3, kind: output, shape index: {}]
  %s4 = sld [smem:[#allocation0]]
  $region61: #{tpu_custom_call.1} parent=0
    _
  %s6 = ssub.s32 1, %s4
  %s7 = scalar_select 0, %s6, %s4
  $region1: #{tpu_custom_call.1} parent=0
    #allocation3 [shape = 'u8[262144]{0}', space=vmem, size = 0x40000, scoped, tag = 'input window, operand 0']
    #allocation4 [shape = 's32[2]{0}', space=sflag, size = 0x8, scoped, tag = 'scoped memory for tpu_custom_call.1']
    #allocation5 [shape = 's32[2]{0}', space=sflag, size = 0x8, scoped, tag = 'scoped memory for tpu_custom_call.1']
    #allocation6 [shape = 'u8[32768]{0}', space=vmem, size = 0x8000, scoped, tag = 'input window, operand 1, single buffered']
    #allocation7 [shape = 's32[1]{0}', space=sflag, size = 0x4, scoped, tag = 'scoped memory for tpu_custom_call.1']
    #allocation8 [shape = 'u8[1024]{0}', space=vmem, size = 0x400, scoped, tag = 'output window, operand 0']
    %8 = vsyncpa [#allocation4], 0
    %s9 = scalar_lea.sflag [#allocation4], 1
    %10 = vsyncpa %s9, 0
    %11 = vsyncpa [#allocation7], 0
    %12 = vsyncpa [#allocation5], 0
    %s13 = scalar_lea.sflag [#allocation5], 1
    %14 = vsyncpa %s13, 0
    loop: start=0, step=1, limit=4
    $region2: #{tpu_custom_call.1} parent=1 // loop_pre_header
      _
    $region3: #{tpu_custom_call.1} parent=1 // loop_header
      %s16 = sphi 0, %s20
      %p17 = scmp.ge.s32.totalorder %s16, 4
      %s23 = sphi 0, %s35
      %s24 = sphi 0, %s31
      %s25 = sphi 0, %s23
      %s26 = sphi 0, %s24
      %s27 = sphi 0, %s25
      %s28 = sphi 0, %s26
      %s40 = sphi 0, %s42
      %s43 = sphi 0, %s40
      %s44 = sphi 0, %s43
      %s60 = sphi 0, %s44
      %s64 = sphi 0, %s64
      %s66 = sphi 0, %s64
      %s67 = sphi 0, %s66
      %s81 = sphi 0, %s67
      %s85 = sphi 0, %s85
      %s87 = sphi 0, %s85
      %s88 = sphi 0, %s87
      %s102 = sphi 0, %s88
      %s108 = sphi 0, %s110
      %s111 = sphi 0, %s108
      %s112 = sphi 0, %s111
      %s128 = sphi 0, %s112
    $region4: #{tpu_custom_call.1} parent=1 // loop_header_branch
      %19 = sbr.rel (%p17) target = $region8
    $region5: #{tpu_custom_call.1} parent=1 // loop_body
      %s21 = ssub.s32 %s16, 1
      %s22 = ssub.s32 %s16, 2
      %s29 = sadd.s32 1, %s24
      %p30 = scmp.ge.s32.totalorder %s29, 1
      %s31 = scalar_select %p30, 0, %s29
      %s32 = sadd.s32 1, %s23
      %s33 = scalar_select %p30, %s32, %s23
      %p34 = scmp.ge.s32.totalorder %s33, 2
      %s35 = scalar_select %p34, 0, %s33
      %s36 = ssub.s32 %s23, %s35
      %s37 = ssub.s32 %s24, %s31
      %s38 = sor.u32 %s36, %s37
      %p39 = scmp.eq.s32.totalorder %s38, 0
      %s41 = sadd.s32 %s40, 1
      %s42 = scalar_select %p39, %s40, %s41
      %p45 = pneg %p39
      %p46 = scmp.eq.s32.totalorder %s16, 1
      %p47 = por %p45, %p46
      %p48 = scmp.ne.s32.totalorder %s40, %s43
      %p49 = scmp.eq.s32.totalorder %s16, 0
      %p50 = por %p48, %p49
      %p51 = scmp.ne.s32.totalorder %s40, %s43
      %p52 = scmp.eq.s32.totalorder %s21, 1
      %p53 = por %p51, %p52
      %p54 = scmp.ne.s32.totalorder %s43, %s44
      %p55 = scmp.eq.s32.totalorder %s21, 0
      %p56 = por %p54, %p55
      %p57 = scmp.ne.s32.totalorder %s43, %s44
      %p58 = scmp.eq.s32.totalorder %s22, 1
      %p59 = por %p57, %p58
      %p61 = scmp.ne.s32.totalorder %s44, %s60
      %p62 = scmp.eq.s32.totalorder %s22, 0
      %p63 = por %p61, %p62
      %s65 = sadd.s32 %s64, 1
      %p68 = scmp.eq.s32.totalorder %s16, 1
      %p69 = scmp.ne.s32.totalorder %s64, %s66
      %p70 = scmp.eq.s32.totalorder %s16, 0
      %p71 = por %p69, %p70
      %p72 = scmp.ne.s32.totalorder %s64, %s66
      %p73 = scmp.eq.s32.totalorder %s21, 1
      %p74 = por %p72, %p73
      %p75 = scmp.ne.s32.totalorder %s66, %s67
      %p76 = scmp.eq.s32.totalorder %s21, 0
      %p77 = por %p75, %p76
      %p78 = scmp.ne.s32.totalorder %s66, %s67
      %p79 = scmp.eq.s32.totalorder %s22, 1
      %p80 = por %p78, %p79
      %p82 = scmp.ne.s32.totalorder %s67, %s81
      %p83 = scmp.eq.s32.totalorder %s22, 0
      %p84 = por %p82, %p83
      %s86 = sadd.s32 %s85, 1
      %p89 = scmp.eq.s32.totalorder %s16, 1
      %p90 = scmp.ne.s32.totalorder %s85, %s87
      %p91 = scmp.eq.s32.totalorder %s16, 0
      %p92 = por %p90, %p91
      %p93 = scmp.ne.s32.totalorder %s85, %s87
      %p94 = scmp.eq.s32.totalorder %s21, 1
      %p95 = por %p93, %p94
      %p96 = scmp.ne.s32.totalorder %s87, %s88
      %p97 = scmp.eq.s32.totalorder %s21, 0
      %p98 = por %p96, %p97
      %p99 = scmp.ne.s32.totalorder %s87, %s88
      %p100 = scmp.eq.s32.totalorder %s22, 1
      %p101 = por %p99, %p100
      %p103 = scmp.ne.s32.totalorder %s88, %s102
      %p104 = scmp.eq.s32.totalorder %s22, 0
      %p105 = por %p103, %p104
      %s106 = ssub.s32 %s23, %s35
      %p107 = scmp.eq.s32.totalorder %s106, 0
      %s109 = sadd.s32 %s108, 1
      %s110 = scalar_select %p107, %s108, %s109
      %p113 = pneg %p107
      %p114 = scmp.eq.s32.totalorder %s16, 1
      %p115 = por %p113, %p114
      %p116 = scmp.ne.s32.totalorder %s108, %s111
      %p117 = scmp.eq.s32.totalorder %s16, 0
      %p118 = por %p116, %p117
      %p119 = scmp.ne.s32.totalorder %s108, %s111
      %p120 = scmp.eq.s32.totalorder %s21, 1
      %p121 = por %p119, %p120
      %p122 = scmp.ne.s32.totalorder %s111, %s112
      %p123 = scmp.eq.s32.totalorder %s21, 0
      %p124 = por %p122, %p123
      %p125 = scmp.ne.s32.totalorder %s111, %s112
      %p126 = scmp.eq.s32.totalorder %s22, 1
      %p127 = por %p125, %p126
      %p129 = scmp.ne.s32.totalorder %s112, %s128
      %p130 = scmp.eq.s32.totalorder %s22, 0
      %p131 = por %p129, %p130
      %p132 = scmp.le.s32.totalorder 1, %s16
      %p133 = scmp.lt.s32.totalorder %s16, 3
      %p134 = pnand %p132, %p133
      %p135 = pneg %p134
      // Predicated region
      $region9: #{tpu_custom_call.1} parent=5 // pred_check
        _
      $region10: #{tpu_custom_call.1} parent=5 // pred_check_branch
        %137 = sbr.rel (%p134) target = $region12
      $region11: #{tpu_custom_call.1} parent=5 // pred_region
        %s138 = ssub.s32 %s16, 1
        // Predicated region
        $region13: #{tpu_custom_call.1} parent=11 // pred_check
          %p139 = pneg %p77
        $region14: #{tpu_custom_call.1} parent=11 // pred_check_branch
          %141 = sbr.rel (%p139) target = $region16
        $region15: #{tpu_custom_call.1} parent=11 // pred_region
          %s143 = ssub.s32 1024, 1024
          %144 = vsyncadd [#allocation7], %s143
          %s145 = sshll.u32 [#allocation6], 4
          %s146 = int_to_ptr.vmem [resolvable:$true] %s145
          %151 = dma.hbm_to_vmem [thread:$0]  %s1, 1024, %s146, [#allocation7], 64, 64, 4
        $region16: #{tpu_custom_call.1} parent=11 // pred_fallthru
          _
        // Predicated region
        $region17: #{tpu_custom_call.1} parent=11 // pred_check
          %p152 = pneg %p98
        $region18: #{tpu_custom_call.1} parent=11 // pred_check_branch
          %154 = sbr.rel (%p152) target = $region20
        $region19: #{tpu_custom_call.1} parent=11 // pred_region
          _
        $region20: #{tpu_custom_call.1} parent=11 // pred_fallthru
          _
      $region12: #{tpu_custom_call.1} parent=5 // pred_fallthru
        _
      %p155 = scmp.lt.s32.totalorder %s16, 2
      // Predicated region
      $region21: #{tpu_custom_call.1} parent=5 // pred_check
        %p156 = pneg %p155
      $region22: #{tpu_custom_call.1} parent=5 // pred_check_branch
        %158 = sbr.rel (%p156) target = $region24
      $region23: #{tpu_custom_call.1} parent=5 // pred_region
        // Predicated region
        $region25: #{tpu_custom_call.1} parent=23 // pred_check
          %p159 = pneg %p50
        $region26: #{tpu_custom_call.1} parent=23 // pred_check_branch
          %161 = sbr.rel (%p159) target = $region28
        $region27: #{tpu_custom_call.1} parent=23 // pred_region
          %s162 = sand.u32 %s40, 1
          %s163 = scalar_lea.sflag [#allocation4], %s162
          %s164 = sand.u32 %s40, 1
          %s165 = smul.addr %s164, 256
          %s166 = scalar_lea.vmem [#allocation3], %s165
          %s167 = smul.u32 32, %s24
          %s169 = ssub.s32 4096, 4096
          %170 = vsyncadd %s163, %s169
          %s171 = smul.addr %s23, 32
          %s172 = sadd.s32 %s167, %s171
          %s173 = smul.addr %s172, 128
          %s174 = scalar_lea.hbm %s0, %s173
          %s175 = sshll.u32 %s166, 4
          %s176 = int_to_ptr.vmem [resolvable:$true] %s175
          %181 = dma.hbm_to_vmem [thread:$0]  %s174, 4096, %s176, %s163, 128, 128, 8
        $region28: #{tpu_custom_call.1} parent=23 // pred_fallthru
          _
      $region24: #{tpu_custom_call.1} parent=5 // pred_fallthru
        _
      %p182 = scmp.le.s32.totalorder 1, %s16
      %p183 = scmp.lt.s32.totalorder %s16, 3
      %p184 = pnand %p182, %p183
      %p185 = pneg %p184
      // Predicated region
      $region29: #{tpu_custom_call.1} parent=5 // pred_check
        _
      $region30: #{tpu_custom_call.1} parent=5 // pred_check_branch
        %187 = sbr.rel (%p184) target = $region32
      $region31: #{tpu_custom_call.1} parent=5 // pred_region
        %s188 = ssub.s32 %s16, 1
        %s189 = sand.u32 %s43, 1
        %s190 = scalar_lea.sflag [#allocation4], %s189
        %s191 = sand.u32 %s43, 1
        %s192 = smul.addr %s191, 256
        %s193 = scalar_lea.vmem [#allocation3], %s192
        // Predicated region
        $region33: #{tpu_custom_call.1} parent=31 // pred_check
          %p194 = pneg %p56
        $region34: #{tpu_custom_call.1} parent=31 // pred_check_branch
          %196 = sbr.rel (%p194) target = $region36
        $region35: #{tpu_custom_call.1} parent=31 // pred_region
          %197 = dma.done %s190, 4096
        $region36: #{tpu_custom_call.1} parent=31 // pred_fallthru
          _
        // Predicated region
        $region37: #{tpu_custom_call.1} parent=31 // pred_check
          %p198 = pneg %p77
        $region38: #{tpu_custom_call.1} parent=31 // pred_check_branch
          %200 = sbr.rel (%p198) target = $region40
        $region39: #{tpu_custom_call.1} parent=31 // pred_region
          %201 = dma.done [#allocation7], 1024
        $region40: #{tpu_custom_call.1} parent=31 // pred_fallthru
          _
        %s202 = sand.u32 %s43, 1
        %s203 = scalar_lea.sflag [#allocation4], %s202
        %s204 = sand.u32 %s43, 1
        %s205 = smul.addr %s204, 256
        %s206 = scalar_lea.vmem [#allocation3], %s205
        %p207 = pneg %p56
        %p208 = pneg %p53
        %p209 = pneg %p77
        %p210 = pneg %p74
        %p211 = pneg %p98
        %p212 = pneg %p95
        %p213 = pneg %p124
        %p214 = pneg %p121
        %s215 = sand.u32 %s111, 1
        %s216 = scalar_lea.sflag [#allocation5], %s215
        %s217 = sand.u32 %s111, 1
        %s218 = scalar_lea.vmem [#allocation8], %s217
        %s219 = smul.u32 32, %s26
        %p221 = scmp.eq.s32.totalorder %s26, 0
        // Predicated region
        $region41: #{tpu_custom_call.1} parent=31 // pred_check
          %p222 = pneg %p221
        $region42: #{tpu_custom_call.1} parent=31 // pred_check_branch
          %224 = sbr.rel (%p222) target = $region44
        $region43: #{tpu_custom_call.1} parent=31 // pred_region
          %225 = vst [vmem:[#allocation2] sm:$0xff] 0.0
        $region44: #{tpu_custom_call.1} parent=31 // pred_fallthru
          _
        %v226 = vld [vmem:[%s193] sm:$0xff]
        %v227 = vld [vmem:[%s193 + $0x8] sm:$0xff]
        %v228 = vld [vmem:[%s193 + $0x10] sm:$0xff]
        %v229 = vld [vmem:[%s193 + $0x18] sm:$0xff]
        %v230 = vld [vmem:[%s193 + $0x20] sm:$0xff]
        %v231 = vld [vmem:[%s193 + $0x28] sm:$0xff]
        %v232 = vld [vmem:[%s193 + $0x30] sm:$0xff]
        %v233 = vld [vmem:[%s193 + $0x38] sm:$0xff]
        %v234 = vld [vmem:[%s193 + $0x40] sm:$0xff]
        %v235 = vld [vmem:[%s193 + $0x48] sm:$0xff]
        %v236 = vld [vmem:[%s193 + $0x50] sm:$0xff]
        %v237 = vld [vmem:[%s193 + $0x58] sm:$0xff]
        %v238 = vld [vmem:[%s193 + $0x60] sm:$0xff]
        %v239 = vld [vmem:[%s193 + $0x68] sm:$0xff]
        %v240 = vld [vmem:[%s193 + $0x70] sm:$0xff]
        %v241 = vld [vmem:[%s193 + $0x78] sm:$0xff]
        %v242 = vld [vmem:[%s193 + $0x80] sm:$0xff]
        %v243 = vld [vmem:[%s193 + $0x88] sm:$0xff]
        %v244 = vld [vmem:[%s193 + $0x90] sm:$0xff]
        %v245 = vld [vmem:[%s193 + $0x98] sm:$0xff]
        %v246 = vld [vmem:[%s193 + $0xa0] sm:$0xff]
        %v247 = vld [vmem:[%s193 + $0xa8] sm:$0xff]
        %v248 = vld [vmem:[%s193 + $0xb0] sm:$0xff]
        %v249 = vld [vmem:[%s193 + $0xb8] sm:$0xff]
        %v250 = vld [vmem:[%s193 + $0xc0] sm:$0xff]
        %v251 = vld [vmem:[%s193 + $0xc8] sm:$0xff]
        %v252 = vld [vmem:[%s193 + $0xd0] sm:$0xff]
        %v253 = vld [vmem:[%s193 + $0xd8] sm:$0xff]
        %v254 = vld [vmem:[%s193 + $0xe0] sm:$0xff]
        %v255 = vld [vmem:[%s193 + $0xe8] sm:$0xff]
        %v256 = vld [vmem:[%s193 + $0xf0] sm:$0xff]
        %v257 = vld [vmem:[%s193 + $0xf8] sm:$0xff]
        %v258 = vpack.c.bf16 %v227, %v226
        %v259 = vpack.c.bf16 %v229, %v228
        %v260 = vpack.c.bf16 %v231, %v230
        %v261 = vpack.c.bf16 %v233, %v232
        %v262 = vpack.c.bf16 %v235, %v234
        %v263 = vpack.c.bf16 %v237, %v236
        %v264 = vpack.c.bf16 %v239, %v238
        %v265 = vpack.c.bf16 %v241, %v240
        %v266 = vpack.c.bf16 %v243, %v242
        %v267 = vpack.c.bf16 %v245, %v244
        %v268 = vpack.c.bf16 %v247, %v246
        %v269 = vpack.c.bf16 %v249, %v248
        %v270 = vpack.c.bf16 %v251, %v250
        %v271 = vpack.c.bf16 %v253, %v252
        %v272 = vpack.c.bf16 %v255, %v254
        %v273 = vpack.c.bf16 %v257, %v256
        %v274 = vld [vmem:[#allocation6] sm:$0xf]
        %v275 = vld [vmem:[#allocation6 + $0x4] sm:$0xf]
        %v276 = vld [vmem:[#allocation6 + $0x8] sm:$0xf]
        %v277 = vld [vmem:[#allocation6 + $0xc] sm:$0xf]
        %v278 = vld [vmem:[#allocation6 + $0x10] sm:$0xf]
        %v279 = vld [vmem:[#allocation6 + $0x14] sm:$0xf]
        %v280 = vld [vmem:[#allocation6 + $0x18] sm:$0xf]
        %v281 = vld [vmem:[#allocation6 + $0x1c] sm:$0xf]
        %v282 = vld [vmem:[#allocation6 + $0x20] sm:$0xf]
        %v283 = vld [vmem:[#allocation6 + $0x24] sm:$0xf]
        %v284 = vld [vmem:[#allocation6 + $0x28] sm:$0xf]
        %v285 = vld [vmem:[#allocation6 + $0x2c] sm:$0xf]
        %v286 = vld [vmem:[#allocation6 + $0x30] sm:$0xf]
        %v287 = vld [vmem:[#allocation6 + $0x34] sm:$0xf]
        %v288 = vld [vmem:[#allocation6 + $0x38] sm:$0xf]
        %v289 = vld [vmem:[#allocation6 + $0x3c] sm:$0xf]
        %v290 = vld [vmem:[%s2] sm:$0x1]
        %v292 = vlaneseq
        %v293 = vshrl.u32 %v292, 7
        %v294 = vsub.s32 0, %v293
        %v295 = vrot.slane %v290, %v294
        %v313 = vunpack.c.l.b16 %v274
        %v314 = vunpack.c.l.b16 %v275
        %v315 = vunpack.c.l.b16 %v276
        %v316 = vunpack.c.l.b16 %v277
        %v317 = vunpack.c.l.b16 %v278
        %v318 = vunpack.c.l.b16 %v279
        %v319 = vunpack.c.l.b16 %v280
        %v320 = vunpack.c.l.b16 %v281
        %v321 = vunpack.c.l.b16 %v282
        %v322 = vunpack.c.l.b16 %v283
        %v323 = vunpack.c.l.b16 %v284
        %v324 = vunpack.c.l.b16 %v285
        %v325 = vunpack.c.l.b16 %v286
        %v326 = vunpack.c.l.b16 %v287
        %v327 = vunpack.c.l.b16 %v288
        %v328 = vunpack.c.l.b16 %v289
        %v329 = vpack.c.b16 %v314, %v313
        %v330 = vpack.c.b16 %v316, %v315
        %v331 = vpack.c.b16 %v318, %v317
        %v332 = vpack.c.b16 %v320, %v319
        %v333 = vpack.c.b16 %v322, %v321
        %v334 = vpack.c.b16 %v324, %v323
        %v335 = vpack.c.b16 %v326, %v325
        %v336 = vpack.c.b16 %v328, %v327
        %345 = vmatprep.subr.bf16.mxu0 0
        %346 = vmatpush1.bf16.msra.mxu0 %v329
        %347 = vmatprep.subr.bf16.mxu0 0
        %348 = vmatpush1.bf16.msra.mxu0 %v330
        %349 = vmatprep.subr.bf16.mxu0 0
        %350 = vmatpush1.bf16.msra.mxu0 %v331
        %351 = vmatprep.subr.bf16.mxu0 0
        %352 = vmatpush1.bf16.msra.mxu0 %v332
        %353 = vmatprep.subr.bf16.mxu0 0
        %354 = vmatpush1.bf16.msra.mxu0 %v333
        %355 = vmatprep.subr.bf16.mxu0 0
        %356 = vmatpush1.bf16.msra.mxu0 %v334
        %357 = vmatprep.subr.bf16.mxu0 0
        %358 = vmatpush1.bf16.msra.mxu0 %v335
        %359 = vmatprep.subr.bf16.mxu0 0
        %360 = vmatpush1.bf16.msra.mxu0 %v336
        %361 = vmatprep.subr.bf16.mxu0 0
        %362 = vmatpush1.bf16.msra.mxu0 0
        %363 = vmatprep.subr.bf16.mxu0 0
        %364 = vmatpush1.bf16.msra.mxu0 0
        %365 = vmatprep.subr.bf16.mxu0 0
        %366 = vmatpush1.bf16.msra.mxu0 0
        %367 = vmatprep.subr.bf16.mxu0 0
        %368 = vmatpush1.bf16.msra.mxu0 0
        %369 = vmatprep.subr.bf16.mxu0 0
        %370 = vmatpush1.bf16.msra.mxu0 0
        %371 = vmatprep.subr.bf16.mxu0 0
        %372 = vmatpush1.bf16.msra.mxu0 0
        %373 = vmatprep.subr.bf16.mxu0 0
        %374 = vmatpush1.bf16.msra.mxu0 0
        %375 = vmatprep.subr.bf16.mxu0 0
        %376 = vmatpush1.bf16.msra.mxu0 0
        %377 = vmatprep.mubr.bf16.mxu0 0
        %378 = vmatmul.mubr.bf16.gmra.mrb[0].mxu0 %v258
        %v379 = vpop.f32.mrb[0].mxu0
        %v380 = vadd.f32 %v295, %v379
        %v381 = vpop.f32.mrb[0].mxu0
        %v382 = vpop.f32.mrb[0].mxu0
        %v383 = vadd.f32 %v295, %v382
        %v384 = vpop.f32.mrb[0].mxu0
        %385 = vmatprep.mubr.bf16.mxu0 0
        %386 = vmatmul.mubr.bf16.gmra.mrb[0].mxu0 %v259
        %v387 = vpop.f32.mrb[0].mxu0
        %v388 = vadd.f32 %v295, %v387
        %v389 = vpop.f32.mrb[0].mxu0
        %v390 = vpop.f32.mrb[0].mxu0
        %v391 = vadd.f32 %v295, %v390
        %v392 = vpop.f32.mrb[0].mxu0
        %393 = vmatprep.mubr.bf16.mxu0 0
        %394 = vmatmul.mubr.bf16.gmra.mrb[0].mxu0 %v260
        %v395 = vpop.f32.mrb[0].mxu0
        %v396 = vadd.f32 %v295, %v395
        %v397 = vpop.f32.mrb[0].mxu0
        %v398 = vpop.f32.mrb[0].mxu0
        %v399 = vadd.f32 %v295, %v398
        %v400 = vpop.f32.mrb[0].mxu0
        %401 = vmatprep.mubr.bf16.mxu0 0
        %402 = vmatmul.mubr.bf16.gmra.mrb[0].mxu0 %v261
        %v403 = vpop.f32.mrb[0].mxu0
        %v404 = vadd.f32 %v295, %v403
        %v405 = vpop.f32.mrb[0].mxu0
        %v406 = vpop.f32.mrb[0].mxu0
        %v407 = vadd.f32 %v295, %v406
        %v408 = vpop.f32.mrb[0].mxu0
        %409 = vmatprep.mubr.bf16.mxu0 0
        %410 = vmatmul.mubr.bf16.gmra.mrb[0].mxu0 %v262
        %v411 = vpop.f32.mrb[0].mxu0
        %v412 = vadd.f32 %v295, %v411
        %v413 = vpop.f32.mrb[0].mxu0
        %v414 = vpop.f32.mrb[0].mxu0
        %v415 = vadd.f32 %v295, %v414
        %v416 = vpop.f32.mrb[0].mxu0
        %417 = vmatprep.mubr.bf16.mxu0 0
        %418 = vmatmul.mubr.bf16.gmra.mrb[0].mxu0 %v263
        %v419 = vpop.f32.mrb[0].mxu0
        %v420 = vadd.f32 %v295, %v419
        %v421 = vpop.f32.mrb[0].mxu0
        %v422 = vpop.f32.mrb[0].mxu0
        %v423 = vadd.f32 %v295, %v422
        %v424 = vpop.f32.mrb[0].mxu0
        %425 = vmatprep.mubr.bf16.mxu0 0
        %426 = vmatmul.mubr.bf16.gmra.mrb[0].mxu0 %v264
        %v427 = vpop.f32.mrb[0].mxu0
        %v428 = vadd.f32 %v295, %v427
        %v429 = vpop.f32.mrb[0].mxu0
        %v430 = vpop.f32.mrb[0].mxu0
        %v431 = vadd.f32 %v295, %v430
        %v432 = vpop.f32.mrb[0].mxu0
        %433 = vmatprep.mubr.bf16.mxu0 0
        %434 = vmatmul.mubr.bf16.gmra.mrb[0].mxu0 %v265
        %v435 = vpop.f32.mrb[0].mxu0
        %v436 = vadd.f32 %v295, %v435
        %v437 = vpop.f32.mrb[0].mxu0
        %v438 = vpop.f32.mrb[0].mxu0
        %v439 = vadd.f32 %v295, %v438
        %v440 = vpop.f32.mrb[0].mxu0
        %441 = vmatprep.mubr.bf16.mxu0 0
        %442 = vmatmul.mubr.bf16.gmra.mrb[0].mxu0 %v266
        %v443 = vpop.f32.mrb[0].mxu0
        %v444 = vadd.f32 %v295, %v443
        %v445 = vpop.f32.mrb[0].mxu0
        %v446 = vpop.f32.mrb[0].mxu0
        %v447 = vadd.f32 %v295, %v446
        %v448 = vpop.f32.mrb[0].mxu0
        %449 = vmatprep.mubr.bf16.mxu0 0
        %450 = vmatmul.mubr.bf16.gmra.mrb[0].mxu0 %v267
        %v451 = vpop.f32.mrb[0].mxu0
        %v452 = vadd.f32 %v295, %v451
        %v453 = vpop.f32.mrb[0].mxu0
        %v454 = vpop.f32.mrb[0].mxu0
        %v455 = vadd.f32 %v295, %v454
        %v456 = vpop.f32.mrb[0].mxu0
        %457 = vmatprep.mubr.bf16.mxu0 0
        %458 = vmatmul.mubr.bf16.gmra.mrb[0].mxu0 %v268
        %v459 = vpop.f32.mrb[0].mxu0
        %v460 = vadd.f32 %v295, %v459
        %v461 = vpop.f32.mrb[0].mxu0
        %v462 = vpop.f32.mrb[0].mxu0
        %v463 = vadd.f32 %v295, %v462
        %v464 = vpop.f32.mrb[0].mxu0
        %465 = vmatprep.mubr.bf16.mxu0 0
        %466 = vmatmul.mubr.bf16.gmra.mrb[0].mxu0 %v269
        %v467 = vpop.f32.mrb[0].mxu0
        %v468 = vadd.f32 %v295, %v467
        %v469 = vpop.f32.mrb[0].mxu0
        %v470 = vpop.f32.mrb[0].mxu0
        %v471 = vadd.f32 %v295, %v470
        %v472 = vpop.f32.mrb[0].mxu0
        %473 = vmatprep.mubr.bf16.mxu0 0
        %474 = vmatmul.mubr.bf16.gmra.mrb[0].mxu0 %v270
        %v475 = vpop.f32.mrb[0].mxu0
        %v476 = vadd.f32 %v295, %v475
        %v477 = vpop.f32.mrb[0].mxu0
        %v478 = vpop.f32.mrb[0].mxu0
        %v479 = vadd.f32 %v295, %v478
        %v480 = vpop.f32.mrb[0].mxu0
        %481 = vmatprep.mubr.bf16.mxu0 0
        %482 = vmatmul.mubr.bf16.gmra.mrb[0].mxu0 %v271
        %v483 = vpop.f32.mrb[0].mxu0
        %v484 = vadd.f32 %v295, %v483
        %v485 = vpop.f32.mrb[0].mxu0
        %v486 = vpop.f32.mrb[0].mxu0
        %v487 = vadd.f32 %v295, %v486
        %v488 = vpop.f32.mrb[0].mxu0
        %489 = vmatprep.mubr.bf16.mxu0 0
        %490 = vmatmul.mubr.bf16.gmra.mrb[0].mxu0 %v272
        %v491 = vpop.f32.mrb[0].mxu0
        %v492 = vadd.f32 %v295, %v491
        %v493 = vpop.f32.mrb[0].mxu0
        %v494 = vpop.f32.mrb[0].mxu0
        %v495 = vadd.f32 %v295, %v494
        %v496 = vpop.f32.mrb[0].mxu0
        %497 = vmatprep.mubr.bf16.mxu0 0
        %498 = vmatmul.mubr.bf16.gmra.mrb[0].mxu0 %v273
        %v499 = vpop.f32.mrb[0].mxu0
        %v500 = vadd.f32 %v295, %v499
        %v501 = vpop.f32.mrb[0].mxu0
        %v502 = vpop.f32.mrb[0].mxu0
        %v503 = vadd.f32 %v295, %v502
        %v504 = vpop.f32.mrb[0].mxu0
        %505 = vdwg.mxu0
        %v506 = vmax.f32 %v380, 0.0
        %v507 = vmax.f32 %v383, 0.0
        %v508 = vmax.f32 %v388, 0.0
        %v509 = vmax.f32 %v391, 0.0
        %v510 = vmax.f32 %v396, 0.0
        %v511 = vmax.f32 %v399, 0.0
        %v512 = vmax.f32 %v404, 0.0
        %v513 = vmax.f32 %v407, 0.0
        %v514 = vmax.f32 %v412, 0.0
        %v515 = vmax.f32 %v415, 0.0
        %v516 = vmax.f32 %v420, 0.0
        %v517 = vmax.f32 %v423, 0.0
        %v518 = vmax.f32 %v428, 0.0
        %v519 = vmax.f32 %v431, 0.0
        %v520 = vmax.f32 %v436, 0.0
        %v521 = vmax.f32 %v439, 0.0
        %v522 = vmax.f32 %v444, 0.0
        %v523 = vmax.f32 %v447, 0.0
        %v524 = vmax.f32 %v452, 0.0
        %v525 = vmax.f32 %v455, 0.0
        %v526 = vmax.f32 %v460, 0.0
        %v527 = vmax.f32 %v463, 0.0
        %v528 = vmax.f32 %v468, 0.0
        %v529 = vmax.f32 %v471, 0.0
        %v530 = vmax.f32 %v476, 0.0
        %v531 = vmax.f32 %v479, 0.0
        %v532 = vmax.f32 %v484, 0.0
        %v533 = vmax.f32 %v487, 0.0
        %v534 = vmax.f32 %v492, 0.0
        %v535 = vmax.f32 %v495, 0.0
        %v536 = vmax.f32 %v500, 0.0
        %v537 = vmax.f32 %v503, 0.0
        %v538 = vld [vmem:[#allocation2] sm:$0xff]
        %v539 = vadd.f32 %v506, %v507
        %v540 = vadd.f32 %v539, %v508
        %v541 = vadd.f32 %v540, %v509
        %v542 = vadd.f32 %v541, %v510
        %v543 = vadd.f32 %v542, %v511
        %v544 = vadd.f32 %v543, %v512
        %v545 = vadd.f32 %v544, %v513
        %v546 = vadd.f32 %v545, %v514
        %v547 = vadd.f32 %v546, %v515
        %v548 = vadd.f32 %v547, %v516
        %v549 = vadd.f32 %v548, %v517
        %v550 = vadd.f32 %v549, %v518
        %v551 = vadd.f32 %v550, %v519
        %v552 = vadd.f32 %v551, %v520
        %v553 = vadd.f32 %v552, %v521
        %v554 = vadd.f32 %v553, %v522
        %v555 = vadd.f32 %v554, %v523
        %v556 = vadd.f32 %v555, %v524
        %v557 = vadd.f32 %v556, %v525
        %v558 = vadd.f32 %v557, %v526
        %v559 = vadd.f32 %v558, %v527
        %v560 = vadd.f32 %v559, %v528
        %v561 = vadd.f32 %v560, %v529
        %v562 = vadd.f32 %v561, %v530
        %v563 = vadd.f32 %v562, %v531
        %v564 = vadd.f32 %v563, %v532
        %v565 = vadd.f32 %v564, %v533
        %v566 = vadd.f32 %v565, %v534
        %v567 = vadd.f32 %v566, %v535
        %v568 = vadd.f32 %v567, %v536
        %v569 = vadd.f32 %v568, %v537
        %v570 = vadd.f32 %v538, %v569
        %571 = vst [vmem:[#allocation2] sm:$0xff] %v570
        // Predicated region
        $region45: #{tpu_custom_call.1} parent=31 // pred_check
          %p572 = pneg %p221
        $region46: #{tpu_custom_call.1} parent=31 // pred_check_branch
          %574 = sbr.rel (%p572) target = $region48
        $region47: #{tpu_custom_call.1} parent=31 // pred_region
          %v575 = vld [vmem:[#allocation2] sm:$0xff]
          %v576 = vrot.slane %v575, 4
          %v577 = vadd.f32 %v575, %v576
          %v578 = vrot.slane %v577, 2
          %v579 = vadd.f32 %v577, %v578
          %v580 = vrot.slane %v579, 1
          %v581 = vadd.f32 %v579, %v580
          %v582 = vmul.f32 %v581, 0.00390625
          %583 = vst [vmem:[%s218] sm:$0x1] %v582
        $region48: #{tpu_custom_call.1} parent=31 // pred_fallthru
          _
        %s584 = sand.u32 %s111, 1
        %s585 = scalar_lea.sflag [#allocation5], %s584
        %s586 = sand.u32 %s111, 1
        %s587 = scalar_lea.vmem [#allocation8], %s586
        // Predicated region
        $region49: #{tpu_custom_call.1} parent=31 // pred_check
          %p588 = pneg %p121
        $region50: #{tpu_custom_call.1} parent=31 // pred_check_branch
          %590 = sbr.rel (%p588) target = $region52
        $region51: #{tpu_custom_call.1} parent=31 // pred_region
          %s592 = ssub.s32 16, 16
          %593 = vsyncadd %s585, %s592
          %s594 = smul.addr %s25, 16
          %s595 = scalar_lea.hbm %s3, %s594
          %s597 = sshll.u32 %s587, 4
          %s598 = int_to_ptr.vmem [resolvable:$true] %s597
          %600 = dma.vmem_to_hbm [thread:$0]  %s598, 16, %s595, %s585
        $region52: #{tpu_custom_call.1} parent=31 // pred_fallthru
          _
      $region32: #{tpu_custom_call.1} parent=5 // pred_fallthru
        _
      %p601 = scmp.le.s32.totalorder 2, %s16
      // Predicated region
      $region53: #{tpu_custom_call.1} parent=5 // pred_check
        %p602 = pneg %p601
      $region54: #{tpu_custom_call.1} parent=5 // pred_check_branch
        %604 = sbr.rel (%p602) target = $region56
      $region55: #{tpu_custom_call.1} parent=5 // pred_region
        %s605 = ssub.s32 %s16, 2
        // Predicated region
        $region57: #{tpu_custom_call.1} parent=55 // pred_check
          %p606 = pneg %p127
        $region58: #{tpu_custom_call.1} parent=55 // pred_check_branch
          %608 = sbr.rel (%p606) target = $region60
        $region59: #{tpu_custom_call.1} parent=55 // pred_region
          %s609 = sand.u32 %s112, 1
          %s610 = scalar_lea.sflag [#allocation5], %s609
          %s611 = sand.u32 %s112, 1
          %s612 = scalar_lea.vmem [#allocation8], %s611
          %613 = dma.done %s610, 16
        $region60: #{tpu_custom_call.1} parent=55 // pred_fallthru
          _
      $region56: #{tpu_custom_call.1} parent=5 // pred_fallthru
        _
    $region6: #{tpu_custom_call.1} parent=1 // loop_footer
      %s20 = sadd.s32 1, %s16
    $region7: #{tpu_custom_call.1} parent=1 // loop_footer_branch
      %15 = sbr.rel target = $region3
    $region8: #{tpu_custom_call.1} parent=1 // loop_exit
      _
    %614 = vsyncpa [#allocation4], 1
    %s615 = scalar_lea.sflag [#allocation4], 1
    %616 = vsyncpa %s615, 1
    %617 = vsyncpa [#allocation7], 1
    %618 = vsyncpa [#allocation5], 1
    %s619 = scalar_lea.sflag [#allocation5], 1
    %620 = vsyncpa %s619, 1

</llo_original>
